<compile_context>
chip_gen: v5e
topology: v5e:2x2
jax: 0.10.0
libtpu: 0.0.40
codegen_flags: <defaults>
</compile_context>

<pallas_src>
import functools

import jax
import jax.numpy as jnp
from jax import lax
from jax.experimental import pallas as pl
from jax.experimental.pallas import tpu as pltpu


# ----------------------------------------------------------------------------
# Pallas conv kernel: same-padding conv + folded affine (BN + bias) + activation
# ----------------------------------------------------------------------------
def _conv_kernel(x_ref, w_ref, s_ref, t_ref, o_ref, xpad_ref, *,
                 KH, KW, PH, PW, TR, H, W, Wpp, Cin, Cout, nonlinear):
    # x_ref   : (H, W, Cin)        bf16  whole (unpadded) image, resident per image
    # w_ref   : (KH*Cin, KW*Cout)  bf16  repacked weights (kh,ci -> K ; kw,co -> N)
    # s_ref   : (1, Cout) f32            folded BN scale
    # t_ref   : (1, Cout) f32            folded BN shift (conv bias folded in)
    # o_ref   : (TR, W, Cout) bf16       one row tile of the output
    # xpad_ref: (H+2*PH, Wpp, Cin) bf16  VMEM scratch, zero-padded image
    #
    # NOTE: the row axis (grid axis 1) must stay the innermost, sequentially
    # executed ("arbitrary") grid dimension: xpad_ref is filled at r == 0 and
    # reused by the remaining row tiles of the same image.
    r = pl.program_id(1)
    Hp = H + 2 * PH

    @pl.when(r == 0)
    def _():
        # Zero only the halo strips; the interior is fully overwritten below.
        xpad_ref[0:PH, :, :] = jnp.zeros((PH, Wpp, Cin), xpad_ref.dtype)
        xpad_ref[PH + H:Hp, :, :] = jnp.zeros((Hp - PH - H, Wpp, Cin),
                                              xpad_ref.dtype)
        xpad_ref[PH:PH + H, 0:PW, :] = jnp.zeros((H, PW, Cin), xpad_ref.dtype)
        xpad_ref[PH:PH + H, PW + W:Wpp, :] = jnp.zeros((H, Wpp - PW - W, Cin),
                                                       xpad_ref.dtype)
        xpad_ref[PH:PH + H, PW:PW + W, :] = x_ref[...]

    row0 = pl.multiple_of(r * TR, TR)

    # LHS strip: (TR, Wpp, KH*Cin), K packed as (kh, ci).  Whole padded rows via
    # direct ref loads; the lane concat packs the KH channel groups per column.
    pieces = [xpad_ref[pl.ds(row0 + kh, TR), :, :] for kh in range(KH)]
    strip = jnp.concatenate(pieces, axis=-1)

    # Single MXU matmul per row tile: K = KH*Cin, N = KW*Cout.
    z = jnp.dot(strip.reshape(TR * Wpp, KH * Cin), w_ref[...],
                preferred_element_type=jnp.float32)
    z = z.reshape(TR, Wpp, KW * Cout)

    # kw reduction: y[t, c, co] = sum_kw z[t, c + kw, kw*Cout + co]
    acc = lax.slice(z, (0, 0, 0), (TR, W, Cout))
    for kw in range(1, KW):
        acc = acc + lax.slice(z, (0, kw, kw * Cout),
                              (TR, kw + W, (kw + 1) * Cout))

    # Folded eval-mode batch norm (conv bias pre-folded into t) + activation.
    acc = acc * s_ref[...].reshape(1, 1, Cout) + t_ref[...].reshape(1, 1, Cout)
    if nonlinear == "leakyrelu":
        acc = jnp.where(acc >= 0, acc, 0.2 * acc)
    elif nonlinear == "tanh":
        acc = jnp.tanh(acc)

    o_ref[...] = acc.astype(o_ref.dtype)


def _round_up(x, m):
    return ((x + m - 1) // m) * m


def _pick_row_tile(H, Wpp, cap=2560):
    """Largest power-of-two row tile dividing H with TR*Wpp (matmul M) <= cap."""
    tr, t = 1, 1
    while t <= H:
        if H % t == 0 and t * Wpp <= cap:
            tr = t
        t *= 2
    return tr


def conv2d_bn_act(x, p, nonlinear):
    """x: (N,H,W,Cin).  Same-pad conv + folded BN/bias + activation, bf16 out."""
    N, H, W, Cin = x.shape
    w = p["w"]
    KH, KW, _, Cout = w.shape
    PH, PW = KH // 2, KW // 2
    Hp = H + 2 * PH
    # Pad the buffer width to the bf16 sublane tile so the (TR, Wpp, K) ->
    # (TR*Wpp, K) reshape is a layout no-op; the extra columns stay zero.
    Wpp = _round_up(W + 2 * PW, 16)

    # kh-in-K / kw-in-N repack: RHS[kh*Cin+ci, kw*Cout+co] = w[kh, kw, ci, co].
    w2 = jnp.transpose(w, (0, 2, 1, 3)).reshape(KH * Cin, KW * Cout)
    w2 = w2.astype(jnp.bfloat16)
    scale = p["scale"].astype(jnp.float32).reshape(1, Cout)
    shift = (p["b"] * p["scale"] + p["shift"]).astype(jnp.float32).reshape(1, Cout)

    TR = _pick_row_tile(H, Wpp)
    R = H // TR

    kernel = functools.partial(
        _conv_kernel, KH=KH, KW=KW, PH=PH, PW=PW, TR=TR, H=H, W=W, Wpp=Wpp,
        Cin=Cin, Cout=Cout, nonlinear=nonlinear)

    return pl.pallas_call(
        kernel,
        out_shape=jax.ShapeDtypeStruct((N, H, W, Cout), jnp.bfloat16),
        grid_spec=pltpu.PrefetchScalarGridSpec(
            num_scalar_prefetch=0,
            grid=(N, R),
            in_specs=[
                # Whole image per batch element; the block index is constant in
                # r so it is DMA'd once per image (pipelined) and stays resident.
                pl.BlockSpec((None, H, W, Cin), lambda n, r: (n, 0, 0, 0)),
                pl.BlockSpec((KH * Cin, KW * Cout), lambda n, r: (0, 0)),
                pl.BlockSpec((1, Cout), lambda n, r: (0, 0)),
                pl.BlockSpec((1, Cout), lambda n, r: (0, 0)),
            ],
            out_specs=pl.BlockSpec((None, TR, W, Cout), lambda n, r: (n, r, 0, 0)),
            scratch_shapes=[pltpu.VMEM((Hp, Wpp, Cin), jnp.bfloat16)],
        ),
        compiler_params=pltpu.CompilerParams(
            # Batch axis is megacore-shardable (keep per-chip batch >= 2 for
            # v7x's two TensorCores); the row axis carries the xpad scratch and
            # must stay sequential ("arbitrary").
            dimension_semantics=("parallel", "arbitrary"),
            vmem_limit_bytes=48 * 1024 * 1024),
    )(x.astype(jnp.bfloat16), w2, scale, shift)


# ----------------------------------------------------------------------------
# Glue: nearest-neighbor resize (matches torch interpolate(mode='nearest'))
# ----------------------------------------------------------------------------
def nearest_resize(x, out_h, out_w):
    # x: (N, H, W, C); integer index math: src = floor(dst * in / out)
    N, H, W, C = x.shape
    hi = (jnp.arange(out_h) * H) // out_h
    wi = (jnp.arange(out_w) * W) // out_w
    return jnp.take(jnp.take(x, hi, axis=1), wi, axis=2)


# ----------------------------------------------------------------------------
# Deterministic parameter init (synthetic, not a checkpoint)
# ----------------------------------------------------------------------------
def init_conv_params(key, cin, cout, k, with_bn):
    kw_, kb, kg, kbt = jax.random.split(key, 4)
    fan_in = cin * k * k
    w = jax.random.normal(kw_, (k, k, cin, cout), jnp.float32) / jnp.sqrt(fan_in)
    b = 0.01 * jax.random.normal(kb, (cout,), jnp.float32)
    if with_bn:
        gamma = 1.0 + 0.1 * jax.random.normal(kg, (cout,), jnp.float32)
        beta = 0.1 * jax.random.normal(kbt, (cout,), jnp.float32)
        running_mean = jnp.zeros((cout,), jnp.float32)
        running_var = jnp.ones((cout,), jnp.float32)
        eps = 1e-5
        scale = gamma / jnp.sqrt(running_var + eps)
        shift = beta - running_mean * scale
    else:
        scale = jnp.ones((cout,), jnp.float32)
        shift = jnp.zeros((cout,), jnp.float32)
    return dict(w=w, b=b, scale=scale, shift=shift)


class ImageDecoderPallas:
    """JAX/Pallas port of ImageDecoder (forward pass, inference semantics)."""

    def __init__(self, num_maps, img_size=128, key=None):
        if key is None:
            key = jax.random.PRNGKey(0)
        ks = jax.random.split(key, 5)
        self.img_size = img_size
        # decoder1: conv0 (num_maps->32, 9x9), conv1 (32->32, 9x9), BN + leakyrelu
        self.layers1 = [
            (init_conv_params(ks[0], num_maps, 32, 9, True), "leakyrelu"),
            (init_conv_params(ks[1], 32, 32, 9, True), "leakyrelu"),
        ]
        # decoder2: conv2/conv3 (32->32, 5x5, BN+leakyrelu), conv4 (32->3, 5x5, tanh)
        self.layers2 = [
            (init_conv_params(ks[2], 32, 32, 5, True), "leakyrelu"),
            (init_conv_params(ks[3], 32, 32, 5, True), "leakyrelu"),
            (init_conv_params(ks[4], 32, 3, 5, False), "tanh"),
        ]

    def __call__(self, x_nchw):
        x = jnp.transpose(x_nchw, (0, 2, 3, 1)).astype(jnp.bfloat16)  # NCHW->NHWC
        if x.shape[2] < self.img_size:            # torch: inputs.size(-1) == W
            half = self.img_size // 2
            x = nearest_resize(x, half, half)
        for p, act in self.layers1:
            x = conv2d_bn_act(x, p, act)
        x = nearest_resize(x, self.img_size, self.img_size)
        for p, act in self.layers2:
            x = conv2d_bn_act(x, p, act)
        return jnp.transpose(x.astype(jnp.float32), (0, 3, 1, 2))     # NHWC->NCHW


# ----------------------------------------------------------------------------
# Pure-JAX reference (mirrors the kernel's bf16-in / f32-accumulate numerics)
# ----------------------------------------------------------------------------
def _ref_conv(x, p, act):
    y = lax.conv_general_dilated(
        x.astype(jnp.bfloat16), p["w"].astype(jnp.bfloat16),
        window_strides=(1, 1), padding="SAME",
        dimension_numbers=("NHWC", "HWIO", "NHWC"),
        preferred_element_type=jnp.float32)
    y = y * p["scale"] + (p["b"] * p["scale"] + p["shift"])
    if act == "leakyrelu":
        y = jnp.where(y >= 0, y, 0.2 * y)
    else:
        y = jnp.tanh(y)
    return y.astype(jnp.bfloat16)


def reference_forward(model, x_nchw):
    x = jnp.transpose(x_nchw, (0, 2, 3, 1)).astype(jnp.bfloat16)
    if x.shape[2] < model.img_size:
        half = model.img_size // 2
        x = nearest_resize(x, half, half)
    for p, act in model.layers1:
        x = _ref_conv(x, p, act)
    x = nearest_resize(x, model.img_size, model.img_size)
    for p, act in model.layers2:
        x = _ref_conv(x, p, act)
    return jnp.transpose(x.astype(jnp.float32), (0, 3, 1, 2))


if __name__ == "__main__":
    key = jax.random.PRNGKey(0)
    kx, kp = jax.random.split(key)

    batch, num_maps, img_size = 2, 4, 16
    # small input, spatial (4x4) < img_size -> triggers the first interpolate
    x = jax.random.normal(kx, (batch, num_maps, 4, 4), jnp.float32)  # NCHW

    model = ImageDecoderPallas(num_maps, img_size=img_size, key=kp)
    out = jax.block_until_ready(model(x))

    assert out.shape == (batch, 3, img_size, img_size), out.shape
    ref = jax.block_until_ready(reference_forward(model, x))
    max_err = float(jnp.max(jnp.abs(out - ref)))
    # bf16 activations on both paths; residual error is accumulation order +
    # occasional 1-ulp bf16 rounding differences.
    assert max_err < 3e-2, f"mismatch vs reference, max abs err = {max_err}"

    print("KERNEL_OK")
</pallas_src>

<mosaic_0001>
module attributes {stable_mosaic.version = 11 : i64} {
  func.func @_conv_kernel(%arg0: i32, %arg1: i32, %arg2: memref<1x8x8x4xbf16, #tpu.memory_space<vmem>>, %arg3: memref<36x288xbf16, #tpu.memory_space<vmem>>, %arg4: memref<1x32xf32, #tpu.memory_space<vmem>>, %arg5: memref<1x32xf32, #tpu.memory_space<vmem>>, %arg6: memref<1x8x8x32xbf16, #tpu.memory_space<vmem>>, %arg7: memref<16x16x4xbf16, #tpu.memory_space<vmem>>) attributes {dimension_semantics = [#tpu.dimension_semantics<parallel>, #tpu.dimension_semantics<arbitrary>], iteration_bounds = array<i64: 2, 1>, scalar_prefetch = 0 : i64, scratch_operands = 1 : i64, tpu.core_type = #tpu.core_type<tc>, window_params = [{transform_indices = @transform_0, window_bounds = array<i64: 1, 8, 8, 4>}, {pipeline_mode = #tpu.pipeline_mode<synchronous>, transform_indices = @transform_1, window_bounds = array<i64: 36, 288>}, {pipeline_mode = #tpu.pipeline_mode<synchronous>, transform_indices = @transform_2, window_bounds = array<i64: 1, 32>}, {pipeline_mode = #tpu.pipeline_mode<synchronous>, transform_indices = @transform_3, window_bounds = array<i64: 1, 32>}, {transform_indices = @transform_4, window_bounds = array<i64: 1, 8, 8, 32>}]} {
    %c0_i32 = arith.constant 0 : i32
    %0 = arith.cmpi eq, %arg1, %c0_i32 : i32
    %1 = arith.extui %0 : i1 to i32
    %c0_i32_0 = arith.constant 0 : i32
    %2 = arith.cmpi ne, %1, %c0_i32_0 : i32
    scf.if %2 {
      %cst_32 = arith.constant 0.000000e+00 : bf16
      %71 = vector.broadcast %cst_32 : bf16 to vector<4x16x4xbf16>
      %c0_33 = arith.constant 0 : index
      %c0_34 = arith.constant 0 : index
      %c0_35 = arith.constant 0 : index
      %72 = vector.load %arg7[%c0_33, %c0_34, %c0_35] : memref<16x16x4xbf16, #tpu.memory_space<vmem>>, vector<4x16x4xbf16>
      tpu.vector_store %arg7[%c0_33, %c0_34, %c0_35], %71 {strides = array<i32>} : memref<16x16x4xbf16, #tpu.memory_space<vmem>>, vector<4x16x4xbf16>,
      %cst_36 = arith.constant 0.000000e+00 : bf16
      %73 = vector.broadcast %cst_36 : bf16 to vector<4x16x4xbf16>
      %c12 = arith.constant 12 : index
      %c0_37 = arith.constant 0 : index
      %c0_38 = arith.constant 0 : index
      %74 = vector.load %arg7[%c12, %c0_37, %c0_38] : memref<16x16x4xbf16, #tpu.memory_space<vmem>>, vector<4x16x4xbf16>
      tpu.vector_store %arg7[%c12, %c0_37, %c0_38], %73 {strides = array<i32>} : memref<16x16x4xbf16, #tpu.memory_space<vmem>>, vector<4x16x4xbf16>,
      %cst_39 = arith.constant 0.000000e+00 : bf16
      %75 = vector.broadcast %cst_39 : bf16 to vector<8x4x4xbf16>
      %c4 = arith.constant 4 : index
      %c0_40 = arith.constant 0 : index
      %c0_41 = arith.constant 0 : index
      %76 = vector.load %arg7[%c4, %c0_40, %c0_41] : memref<16x16x4xbf16, #tpu.memory_space<vmem>>, vector<8x4x4xbf16>
      tpu.vector_store %arg7[%c4, %c0_40, %c0_41], %75 {strides = array<i32>} : memref<16x16x4xbf16, #tpu.memory_space<vmem>>, vector<8x4x4xbf16>,
      %cst_42 = arith.constant 0.000000e+00 : bf16
      %77 = vector.broadcast %cst_42 : bf16 to vector<8x4x4xbf16>
      %c4_43 = arith.constant 4 : index
      %c12_44 = arith.constant 12 : index
      %c0_45 = arith.constant 0 : index
      %78 = vector.load %arg7[%c4_43, %c12_44, %c0_45] : memref<16x16x4xbf16, #tpu.memory_space<vmem>>, vector<8x4x4xbf16>
      tpu.vector_store %arg7[%c4_43, %c12_44, %c0_45], %77 {strides = array<i32>} : memref<16x16x4xbf16, #tpu.memory_space<vmem>>, vector<8x4x4xbf16>,
      %c0_46 = arith.constant 0 : index
      %c0_47 = arith.constant 0 : index
      %c0_48 = arith.constant 0 : index
      %c0_49 = arith.constant 0 : index
      %79 = vector.load %arg2[%c0_46, %c0_47, %c0_48, %c0_49] : memref<1x8x8x4xbf16, #tpu.memory_space<vmem>>, vector<1x8x8x4xbf16>
      %80 = vector.shape_cast %79 : vector<1x8x8x4xbf16> to vector<8x8x4xbf16>
      %c4_50 = arith.constant 4 : index
      %c4_51 = arith.constant 4 : index
      %c0_52 = arith.constant 0 : index
      %81 = vector.load %arg7[%c4_50, %c4_51, %c0_52] : memref<16x16x4xbf16, #tpu.memory_space<vmem>>, vector<8x8x4xbf16>
      tpu.vector_store %arg7[%c4_50, %c4_51, %c0_52], %80 {strides = array<i32>} : memref<16x16x4xbf16, #tpu.memory_space<vmem>>, vector<8x8x4xbf16>,
    } else {
    }
    %c8_i32 = arith.constant 8 : i32
    %3 = arith.muli %arg1, %c8_i32 : i32
    %4 = tpu.assume_multiple %3, 8 : i32
    %c0_i32_1 = arith.constant 0 : i32
    %5 = arith.addi %4, %c0_i32_1 : i32
    %6 = arith.index_cast %5 : i32 to index
    %c0 = arith.constant 0 : index
    %c0_2 = arith.constant 0 : index
    %7 = vector.load %arg7[%6, %c0, %c0_2] : memref<16x16x4xbf16, #tpu.memory_space<vmem>>, vector<8x16x4xbf16>
    %c1_i32 = arith.constant 1 : i32
    %8 = arith.addi %4, %c1_i32 : i32
    %9 = arith.index_cast %8 : i32 to index
    %c0_3 = arith.constant 0 : index
    %c0_4 = arith.constant 0 : index
    %10 = vector.load %arg7[%9, %c0_3, %c0_4] : memref<16x16x4xbf16, #tpu.memory_space<vmem>>, vector<8x16x4xbf16>
    %c2_i32 = arith.constant 2 : i32
    %11 = arith.addi %4, %c2_i32 : i32
    %12 = arith.index_cast %11 : i32 to index
    %c0_5 = arith.constant 0 : index
    %c0_6 = arith.constant 0 : index
    %13 = vector.load %arg7[%12, %c0_5, %c0_6] : memref<16x16x4xbf16, #tpu.memory_space<vmem>>, vector<8x16x4xbf16>
    %c3_i32 = arith.constant 3 : i32
    %14 = arith.addi %4, %c3_i32 : i32
    %15 = arith.index_cast %14 : i32 to index
    %c0_7 = arith.constant 0 : index
    %c0_8 = arith.constant 0 : index
    %16 = vector.load %arg7[%15, %c0_7, %c0_8] : memref<16x16x4xbf16, #tpu.memory_space<vmem>>, vector<8x16x4xbf16>
    %c4_i32 = arith.constant 4 : i32
    %17 = arith.addi %4, %c4_i32 : i32
    %18 = arith.index_cast %17 : i32 to index
    %c0_9 = arith.constant 0 : index
    %c0_10 = arith.constant 0 : index
    %19 = vector.load %arg7[%18, %c0_9, %c0_10] : memref<16x16x4xbf16, #tpu.memory_space<vmem>>, vector<8x16x4xbf16>
    %c5_i32 = arith.constant 5 : i32
    %20 = arith.addi %4, %c5_i32 : i32
    %21 = arith.index_cast %20 : i32 to index
    %c0_11 = arith.constant 0 : index
    %c0_12 = arith.constant 0 : index
    %22 = vector.load %arg7[%21, %c0_11, %c0_12] : memref<16x16x4xbf16, #tpu.memory_space<vmem>>, vector<8x16x4xbf16>
    %c6_i32 = arith.constant 6 : i32
    %23 = arith.addi %4, %c6_i32 : i32
    %24 = arith.index_cast %23 : i32 to index
    %c0_13 = arith.constant 0 : index
    %c0_14 = arith.constant 0 : index
    %25 = vector.load %arg7[%24, %c0_13, %c0_14] : memref<16x16x4xbf16, #tpu.memory_space<vmem>>, vector<8x16x4xbf16>
    %c7_i32 = arith.constant 7 : i32
    %26 = arith.addi %4, %c7_i32 : i32
    %27 = arith.index_cast %26 : i32 to index
    %c0_15 = arith.constant 0 : index
    %c0_16 = arith.constant 0 : index
    %28 = vector.load %arg7[%27, %c0_15, %c0_16] : memref<16x16x4xbf16, #tpu.memory_space<vmem>>, vector<8x16x4xbf16>
    %c8_i32_17 = arith.constant 8 : i32
    %29 = arith.addi %4, %c8_i32_17 : i32
    %30 = arith.index_cast %29 : i32 to index
    %c0_18 = arith.constant 0 : index
    %c0_19 = arith.constant 0 : index
    %31 = vector.load %arg7[%30, %c0_18, %c0_19] : memref<16x16x4xbf16, #tpu.memory_space<vmem>>, vector<8x16x4xbf16>
    %32 = tpu.concatenate %7, %10, %13, %16, %19, %22, %25, %28, %31 in 2 : vector<8x16x4xbf16>, vector<8x16x4xbf16>, vector<8x16x4xbf16>, vector<8x16x4xbf16>, vector<8x16x4xbf16>, vector<8x16x4xbf16>, vector<8x16x4xbf16>, vector<8x16x4xbf16>, vector<8x16x4xbf16> -> vector<8x16x36xbf16>
    %33 = vector.shape_cast %32 : vector<8x16x36xbf16> to vector<128x36xbf16>
    %c0_20 = arith.constant 0 : index
    %c0_21 = arith.constant 0 : index
    %34 = vector.load %arg3[%c0_20, %c0_21] : memref<36x288xbf16, #tpu.memory_space<vmem>>, vector<36x288xbf16>
    %cst = arith.constant dense<0.000000e+00> : vector<128x288xf32>
    %35 = tpu.matmul %33, %34, %cst {dimension_numbers = #tpu.dot_dimension_numbers<[1], [0], [0], [1], [0, 0, 1, 1], [], []>} : vector<128x36xbf16>, vector<36x288xbf16>, vector<128x288xf32> -> vector<128x288xf32>
    %36 = vector.shape_cast %35 : vector<128x288xf32> to vector<8x16x288xf32>
    %37 = vector.extract_strided_slice %36 {offsets = [0, 0, 0], sizes = [8, 8, 32], strides = [1, 1, 1]} : vector<8x16x288xf32> to vector<8x8x32xf32>
    %38 = vector.extract_strided_slice %36 {offsets = [0, 1, 32], sizes = [8, 8, 32], strides = [1, 1, 1]} : vector<8x16x288xf32> to vector<8x8x32xf32>
    %39 = arith.addf %37, %38 : vector<8x8x32xf32>
    %40 = vector.extract_strided_slice %36 {offsets = [0, 2, 64], sizes = [8, 8, 32], strides = [1, 1, 1]} : vector<8x16x288xf32> to vector<8x8x32xf32>
    %41 = arith.addf %39, %40 : vector<8x8x32xf32>
    %42 = vector.extract_strided_slice %36 {offsets = [0, 3, 96], sizes = [8, 8, 32], strides = [1, 1, 1]} : vector<8x16x288xf32> to vector<8x8x32xf32>
    %43 = arith.addf %41, %42 : vector<8x8x32xf32>
    %44 = vector.extract_strided_slice %36 {offsets = [0, 4, 128], sizes = [8, 8, 32], strides = [1, 1, 1]} : vector<8x16x288xf32> to vector<8x8x32xf32>
    %45 = arith.addf %43, %44 : vector<8x8x32xf32>
    %46 = vector.extract_strided_slice %36 {offsets = [0, 5, 160], sizes = [8, 8, 32], strides = [1, 1, 1]} : vector<8x16x288xf32> to vector<8x8x32xf32>
    %47 = arith.addf %45, %46 : vector<8x8x32xf32>
    %48 = vector.extract_strided_slice %36 {offsets = [0, 6, 192], sizes = [8, 8, 32], strides = [1, 1, 1]} : vector<8x16x288xf32> to vector<8x8x32xf32>
    %49 = arith.addf %47, %48 : vector<8x8x32xf32>
    %50 = vector.extract_strided_slice %36 {offsets = [0, 7, 224], sizes = [8, 8, 32], strides = [1, 1, 1]} : vector<8x16x288xf32> to vector<8x8x32xf32>
    %51 = arith.addf %49, %50 : vector<8x8x32xf32>
    %52 = vector.extract_strided_slice %36 {offsets = [0, 8, 256], sizes = [8, 8, 32], strides = [1, 1, 1]} : vector<8x16x288xf32> to vector<8x8x32xf32>
    %53 = arith.addf %51, %52 : vector<8x8x32xf32>
    %c0_22 = arith.constant 0 : index
    %c0_23 = arith.constant 0 : index
    %54 = vector.load %arg4[%c0_22, %c0_23] : memref<1x32xf32, #tpu.memory_space<vmem>>, vector<1x32xf32>
    %55 = vector.shape_cast %54 : vector<1x32xf32> to vector<1x1x32xf32>
    %56 = vector.broadcast %55 : vector<1x1x32xf32> to vector<8x8x32xf32>
    %57 = arith.mulf %53, %56 : vector<8x8x32xf32>
    %c0_24 = arith.constant 0 : index
    %c0_25 = arith.constant 0 : index
    %58 = vector.load %arg5[%c0_24, %c0_25] : memref<1x32xf32, #tpu.memory_space<vmem>>, vector<1x32xf32>
    %59 = vector.shape_cast %58 : vector<1x32xf32> to vector<1x1x32xf32>
    %60 = vector.broadcast %59 : vector<1x1x32xf32> to vector<8x8x32xf32>
    %61 = arith.addf %57, %60 : vector<8x8x32xf32>
    %cst_26 = arith.constant 0.000000e+00 : f32
    %62 = vector.broadcast %cst_26 : f32 to vector<8x8x32xf32>
    %63 = arith.cmpf oge, %61, %62 : vector<8x8x32xf32>
    %cst_27 = arith.constant 2.000000e-01 : f32
    %64 = vector.broadcast %cst_27 : f32 to vector<8x8x32xf32>
    %65 = arith.mulf %64, %61 : vector<8x8x32xf32>
    %66 = arith.select %63, %61, %65 : vector<8x8x32xi1>, vector<8x8x32xf32>
    %67 = arith.truncf %66 : vector<8x8x32xf32> to vector<8x8x32xbf16>
    %c0_28 = arith.constant 0 : index
    %c0_29 = arith.constant 0 : index
    %c0_30 = arith.constant 0 : index
    %c0_31 = arith.constant 0 : index
    %68 = vector.load %arg6[%c0_28, %c0_29, %c0_30, %c0_31] : memref<1x8x8x32xbf16, #tpu.memory_space<vmem>>, vector<1x8x8x32xbf16>
    %69 = vector.shape_cast %68 : vector<1x8x8x32xbf16> to vector<8x8x32xbf16>
    %70 = vector.shape_cast %67 : vector<8x8x32xbf16> to vector<1x8x8x32xbf16>
    tpu.vector_store %arg6[%c0_28, %c0_29, %c0_30, %c0_31], %70 {strides = array<i32>} : memref<1x8x8x32xbf16, #tpu.memory_space<vmem>>, vector<1x8x8x32xbf16>,
    return
  }
  func.func @transform_0(%arg0: i32, %arg1: i32) -> (i32, i32, i32, i32) {
    %c0_i32 = arith.constant 0 : i32
    %c0_i32_0 = arith.constant 0 : i32
    %c0_i32_1 = arith.constant 0 : i32
    %c0_i32_2 = arith.constant 0 : i32
    return %arg0, %c0_i32, %c0_i32_0, %c0_i32_1 : i32, i32, i32, i32
  }
  func.func @transform_1(%arg0: i32, %arg1: i32) -> (i32, i32) {
    %c0_i32 = arith.constant 0 : i32
    %c0_i32_0 = arith.constant 0 : i32
    %c0_i32_1 = arith.constant 0 : i32
    return %c0_i32, %c0_i32_0 : i32, i32
  }
  func.func @transform_2(%arg0: i32, %arg1: i32) -> (i32, i32) {
    %c0_i32 = arith.constant 0 : i32
    %c0_i32_0 = arith.constant 0 : i32
    %c0_i32_1 = arith.constant 0 : i32
    return %c0_i32, %c0_i32_0 : i32, i32
  }
  func.func @transform_3(%arg0: i32, %arg1: i32) -> (i32, i32) {
    %c0_i32 = arith.constant 0 : i32
    %c0_i32_0 = arith.constant 0 : i32
    %c0_i32_1 = arith.constant 0 : i32
    return %c0_i32, %c0_i32_0 : i32, i32
  }
  func.func @transform_4(%arg0: i32, %arg1: i32) -> (i32, i32, i32, i32) {
    %c0_i32 = arith.constant 0 : i32
    %c0_i32_0 = arith.constant 0 : i32
    %c0_i32_1 = arith.constant 0 : i32
    return %arg0, %arg1, %c0_i32, %c0_i32_0 : i32, i32, i32, i32
  }
}

</mosaic_0001>

<llo_original>
// kernel: tpu_custom_call.1
$region0: #{tpu_custom_call.1}
  #allocation0 [shape = 'u32[]', space=smem, size = 0x4, offset = 0x4, fixed_abs, tag = 'smem constant byte address 0x4 - core index']
  #allocation1 [shape = 'u32[72,128]{1,0:T(1,128)}', space=vmem, size = 0x9000, scoped, tag = 'internal scratch']
  #allocation2 [shape = 'bf16[16,16,4]{2,1,0:T(8,128)(2,1)}', space=vmem, size = 0x10000, scoped, tag = 'scratch operand']
  %s0 = inlined_call_operand.vmem [shape: bf16[2,8,8,4], index: 0, kind: input, shape index: {}]
  %s1 = inlined_call_operand.vmem [shape: bf16[36,288], index: 1, kind: input, shape index: {}]
  %s2 = inlined_call_operand.vmem [shape: f32[1,32], index: 2, kind: input, shape index: {}]
  %s3 = inlined_call_operand.vmem [shape: f32[1,32], index: 3, kind: input, shape index: {}]
  %s4 = inlined_call_operand.hbm [shape: bf16[2,8,8,32], index: 4, kind: output, shape index: {}]
  %s5 = sld [smem:[#allocation0]]
  $region53: #{tpu_custom_call.1} parent=0
    _
  %s7 = ssub.s32 1, %s5
  %s8 = scalar_select 0, %s7, %s5
  $region1: #{tpu_custom_call.1} parent=0
    #allocation3 [shape = 'u8[32768]{0}', space=vmem, size = 0x8000, scoped, tag = 'output window, operand 0']
    #allocation4 [shape = 's32[2]{0}', space=sflag, size = 0x8, scoped, tag = 'scoped memory for tpu_custom_call.1']
    %9 = vsyncpa [#allocation4], 0
    %s10 = scalar_lea.sflag [#allocation4], 1
    %11 = vsyncpa %s10, 0
    loop: start=0, step=1, limit=4
    $region2: #{tpu_custom_call.1} parent=1 // loop_pre_header
      _
    $region3: #{tpu_custom_call.1} parent=1 // loop_header
      %s13 = sphi 0, %s17
      %p14 = scmp.ge.s32.totalorder %s13, 4
      %s20 = sphi 0, %s32
      %s21 = sphi 0, %s28
      %s22 = sphi 0, %s20
      %s23 = sphi 0, %s21
      %s24 = sphi 0, %s22
      %s25 = sphi 0, %s23
      %s35 = sphi 0, %s37
      %s38 = sphi 0, %s35
      %s39 = sphi 0, %s38
      %s55 = sphi 0, %s39
      %s59 = sphi 0, %s59
      %s61 = sphi 0, %s59
      %s62 = sphi 0, %s61
      %s76 = sphi 0, %s62
      %s80 = sphi 0, %s80
      %s82 = sphi 0, %s80
      %s83 = sphi 0, %s82
      %s97 = sphi 0, %s83
      %s101 = sphi 0, %s101
      %s103 = sphi 0, %s101
      %s104 = sphi 0, %s103
      %s118 = sphi 0, %s104
      %s126 = sphi 0, %s128
      %s129 = sphi 0, %s126
      %s130 = sphi 0, %s129
      %s146 = sphi 0, %s130
    $region4: #{tpu_custom_call.1} parent=1 // loop_header_branch
      %16 = sbr.rel (%p14) target = $region8
    $region5: #{tpu_custom_call.1} parent=1 // loop_body
      %s18 = ssub.s32 %s13, 1
      %s19 = ssub.s32 %s13, 2
      %s26 = sadd.s32 1, %s21
      %p27 = scmp.ge.s32.totalorder %s26, 1
      %s28 = scalar_select %p27, 0, %s26
      %s29 = sadd.s32 1, %s20
      %s30 = scalar_select %p27, %s29, %s20
      %p31 = scmp.ge.s32.totalorder %s30, 2
      %s32 = scalar_select %p31, 0, %s30
      %s33 = ssub.s32 %s20, %s32
      %p34 = scmp.eq.s32.totalorder %s33, 0
      %s36 = sadd.s32 %s35, 1
      %s37 = scalar_select %p34, %s35, %s36
      %p40 = pneg %p34
      %p41 = scmp.eq.s32.totalorder %s13, 1
      %p42 = por %p40, %p41
      %p43 = scmp.ne.s32.totalorder %s35, %s38
      %p44 = scmp.eq.s32.totalorder %s13, 0
      %p45 = por %p43, %p44
      %p46 = scmp.ne.s32.totalorder %s35, %s38
      %p47 = scmp.eq.s32.totalorder %s18, 1
      %p48 = por %p46, %p47
      %p49 = scmp.ne.s32.totalorder %s38, %s39
      %p50 = scmp.eq.s32.totalorder %s18, 0
      %p51 = por %p49, %p50
      %p52 = scmp.ne.s32.totalorder %s38, %s39
      %p53 = scmp.eq.s32.totalorder %s19, 1
      %p54 = por %p52, %p53
      %p56 = scmp.ne.s32.totalorder %s39, %s55
      %p57 = scmp.eq.s32.totalorder %s19, 0
      %p58 = por %p56, %p57
      %s60 = sadd.s32 %s59, 1
      %p63 = scmp.eq.s32.totalorder %s13, 1
      %p64 = scmp.ne.s32.totalorder %s59, %s61
      %p65 = scmp.eq.s32.totalorder %s13, 0
      %p66 = por %p64, %p65
      %p67 = scmp.ne.s32.totalorder %s59, %s61
      %p68 = scmp.eq.s32.totalorder %s18, 1
      %p69 = por %p67, %p68
      %p70 = scmp.ne.s32.totalorder %s61, %s62
      %p71 = scmp.eq.s32.totalorder %s18, 0
      %p72 = por %p70, %p71
      %p73 = scmp.ne.s32.totalorder %s61, %s62
      %p74 = scmp.eq.s32.totalorder %s19, 1
      %p75 = por %p73, %p74
      %p77 = scmp.ne.s32.totalorder %s62, %s76
      %p78 = scmp.eq.s32.totalorder %s19, 0
      %p79 = por %p77, %p78
      %s81 = sadd.s32 %s80, 1
      %p84 = scmp.eq.s32.totalorder %s13, 1
      %p85 = scmp.ne.s32.totalorder %s80, %s82
      %p86 = scmp.eq.s32.totalorder %s13, 0
      %p87 = por %p85, %p86
      %p88 = scmp.ne.s32.totalorder %s80, %s82
      %p89 = scmp.eq.s32.totalorder %s18, 1
      %p90 = por %p88, %p89
      %p91 = scmp.ne.s32.totalorder %s82, %s83
      %p92 = scmp.eq.s32.totalorder %s18, 0
      %p93 = por %p91, %p92
      %p94 = scmp.ne.s32.totalorder %s82, %s83
      %p95 = scmp.eq.s32.totalorder %s19, 1
      %p96 = por %p94, %p95
      %p98 = scmp.ne.s32.totalorder %s83, %s97
      %p99 = scmp.eq.s32.totalorder %s19, 0
      %p100 = por %p98, %p99
      %s102 = sadd.s32 %s101, 1
      %p105 = scmp.eq.s32.totalorder %s13, 1
      %p106 = scmp.ne.s32.totalorder %s101, %s103
      %p107 = scmp.eq.s32.totalorder %s13, 0
      %p108 = por %p106, %p107
      %p109 = scmp.ne.s32.totalorder %s101, %s103
      %p110 = scmp.eq.s32.totalorder %s18, 1
      %p111 = por %p109, %p110
      %p112 = scmp.ne.s32.totalorder %s103, %s104
      %p113 = scmp.eq.s32.totalorder %s18, 0
      %p114 = por %p112, %p113
      %p115 = scmp.ne.s32.totalorder %s103, %s104
      %p116 = scmp.eq.s32.totalorder %s19, 1
      %p117 = por %p115, %p116
      %p119 = scmp.ne.s32.totalorder %s104, %s118
      %p120 = scmp.eq.s32.totalorder %s19, 0
      %p121 = por %p119, %p120
      %s122 = ssub.s32 %s20, %s32
      %s123 = ssub.s32 %s21, %s28
      %s124 = sor.u32 %s122, %s123
      %p125 = scmp.eq.s32.totalorder %s124, 0
      %s127 = sadd.s32 %s126, 1
      %s128 = scalar_select %p125, %s126, %s127
      %p131 = pneg %p125
      %p132 = scmp.eq.s32.totalorder %s13, 1
      %p133 = por %p131, %p132
      %p134 = scmp.ne.s32.totalorder %s126, %s129
      %p135 = scmp.eq.s32.totalorder %s13, 0
      %p136 = por %p134, %p135
      %p137 = scmp.ne.s32.totalorder %s126, %s129
      %p138 = scmp.eq.s32.totalorder %s18, 1
      %p139 = por %p137, %p138
      %p140 = scmp.ne.s32.totalorder %s129, %s130
      %p141 = scmp.eq.s32.totalorder %s18, 0
      %p142 = por %p140, %p141
      %p143 = scmp.ne.s32.totalorder %s129, %s130
      %p144 = scmp.eq.s32.totalorder %s19, 1
      %p145 = por %p143, %p144
      %p147 = scmp.ne.s32.totalorder %s130, %s146
      %p148 = scmp.eq.s32.totalorder %s19, 0
      %p149 = por %p147, %p148
      %p150 = scmp.le.s32.totalorder 1, %s13
      %p151 = scmp.lt.s32.totalorder %s13, 3
      %p152 = pnand %p150, %p151
      %p153 = pneg %p152
      // Predicated region
      $region9: #{tpu_custom_call.1} parent=5 // pred_check
        _
      $region10: #{tpu_custom_call.1} parent=5 // pred_check_branch
        %155 = sbr.rel (%p152) target = $region12
      $region11: #{tpu_custom_call.1} parent=5 // pred_region
        %s156 = ssub.s32 %s13, 1
        // Predicated region
        $region13: #{tpu_custom_call.1} parent=11 // pred_check
          %p157 = pneg %p72
        $region14: #{tpu_custom_call.1} parent=11 // pred_check_branch
          %159 = sbr.rel (%p157) target = $region16
        $region15: #{tpu_custom_call.1} parent=11 // pred_region
          _
        $region16: #{tpu_custom_call.1} parent=11 // pred_fallthru
          _
        // Predicated region
        $region17: #{tpu_custom_call.1} parent=11 // pred_check
          %p160 = pneg %p93
        $region18: #{tpu_custom_call.1} parent=11 // pred_check_branch
          %162 = sbr.rel (%p160) target = $region20
        $region19: #{tpu_custom_call.1} parent=11 // pred_region
          _
        $region20: #{tpu_custom_call.1} parent=11 // pred_fallthru
          _
        // Predicated region
        $region21: #{tpu_custom_call.1} parent=11 // pred_check
          %p163 = pneg %p114
        $region22: #{tpu_custom_call.1} parent=11 // pred_check_branch
          %165 = sbr.rel (%p163) target = $region24
        $region23: #{tpu_custom_call.1} parent=11 // pred_region
          _
        $region24: #{tpu_custom_call.1} parent=11 // pred_fallthru
          _
      $region12: #{tpu_custom_call.1} parent=5 // pred_fallthru
        _
      %p166 = scmp.lt.s32.totalorder %s13, 2
      // Predicated region
      $region25: #{tpu_custom_call.1} parent=5 // pred_check
        %p167 = pneg %p166
      $region26: #{tpu_custom_call.1} parent=5 // pred_check_branch
        %169 = sbr.rel (%p167) target = $region28
      $region27: #{tpu_custom_call.1} parent=5 // pred_region
        // Predicated region
        $region29: #{tpu_custom_call.1} parent=27 // pred_check
          %p170 = pneg %p45
        $region30: #{tpu_custom_call.1} parent=27 // pred_check_branch
          %172 = sbr.rel (%p170) target = $region32
        $region31: #{tpu_custom_call.1} parent=27 // pred_region
          %p173 = scmp.lt.s32.totalorder %s20, 1
          %s174 = scalar_select %p173, %s20, 1
          %s175 = smul.addr %s174, 8
          %s176 = smul.addr %s175, 4
          %s177 = scalar_lea.vmem %s0, %s176
        $region32: #{tpu_custom_call.1} parent=27 // pred_fallthru
          _
      $region28: #{tpu_custom_call.1} parent=5 // pred_fallthru
        _
      %p178 = scmp.le.s32.totalorder 1, %s13
      %p179 = scmp.lt.s32.totalorder %s13, 3
      %p180 = pnand %p178, %p179
      %p181 = pneg %p180
      // Predicated region
      $region33: #{tpu_custom_call.1} parent=5 // pred_check
        _
      $region34: #{tpu_custom_call.1} parent=5 // pred_check_branch
        %183 = sbr.rel (%p180) target = $region36
      $region35: #{tpu_custom_call.1} parent=5 // pred_region
        %s184 = ssub.s32 %s13, 1
        %p185 = scmp.lt.s32.totalorder %s22, 1
        %s186 = scalar_select %p185, %s22, 1
        %s187 = smul.addr %s186, 8
        %s188 = smul.addr %s187, 4
        %s189 = scalar_lea.vmem %s0, %s188
        %p190 = pneg %p51
        %p191 = pneg %p48
        %p192 = pneg %p72
        %p193 = pneg %p69
        %p194 = pneg %p93
        %p195 = pneg %p90
        %p196 = pneg %p114
        %p197 = pneg %p111
        %p198 = pneg %p142
        %p199 = pneg %p139
        %s200 = sand.u32 %s129, 1
        %s201 = scalar_lea.sflag [#allocation4], %s200
        %s202 = sand.u32 %s129, 1
        %s203 = smul.addr %s202, 32
        %s204 = scalar_lea.vmem [#allocation3], %s203
        %p205 = scmp.lt.s32.totalorder %s22, 1
        %s206 = scalar_select %p205, %s22, 1
        %s207 = smul.addr %s206, 8
        %s208 = smul.addr %s207, 4
        %s209 = scalar_lea.vmem %s0, %s208
        %s210 = smul.u32 8, %s23
        %p212 = scmp.eq.s32.totalorder %s23, 0
        // Predicated region
        $region37: #{tpu_custom_call.1} parent=35 // pred_check
          %p213 = pneg %p212
        $region38: #{tpu_custom_call.1} parent=35 // pred_check_branch
          %215 = sbr.rel (%p213) target = $region40
        $region39: #{tpu_custom_call.1} parent=35 // pred_region
          %vm216 = vcmask 27648
          %217 = vst.msk [vmem:[#allocation2] sm:$0xf] %vm216, 0
          %218 = vst.msk [vmem:[#allocation2 + $0x4] sm:$0xf] %vm216, 0
          %219 = vst.msk [vmem:[#allocation2 + $0x8] sm:$0xf] %vm216, 0
          %220 = vst.msk [vmem:[#allocation2 + $0xc] sm:$0xf] %vm216, 0
          %221 = vst.msk [vmem:[#allocation2 + $0x10] sm:$0xf] %vm216, 0
          %222 = vst.msk [vmem:[#allocation2 + $0x14] sm:$0xf] %vm216, 0
          %223 = vst.msk [vmem:[#allocation2 + $0x18] sm:$0xf] %vm216, 0
          %224 = vst.msk [vmem:[#allocation2 + $0x1c] sm:$0xf] %vm216, 0
          %s225 = scalar_lea.vmem [#allocation2], 96
          %226 = vst.msk [vmem:[%s225] sm:$0xf] %vm216, 0
          %227 = vst.msk [vmem:[%s225 + $0x4] sm:$0xf] %vm216, 0
          %228 = vst.msk [vmem:[%s225 + $0x8] sm:$0xf] %vm216, 0
          %229 = vst.msk [vmem:[%s225 + $0xc] sm:$0xf] %vm216, 0
          %230 = vst.msk [vmem:[%s225 + $0x10] sm:$0xf] %vm216, 0
          %231 = vst.msk [vmem:[%s225 + $0x14] sm:$0xf] %vm216, 0
          %232 = vst.msk [vmem:[%s225 + $0x18] sm:$0xf] %vm216, 0
          %233 = vst.msk [vmem:[%s225 + $0x1c] sm:$0xf] %vm216, 0
          %s234 = scalar_lea.vmem [#allocation2], 32
          %vm235 = vcmask 25600
          %236 = vst.msk [vmem:[%s234] sm:$0x3] %vm235, 0
          %237 = vst.msk [vmem:[%s234 + $0x8] sm:$0x3] %vm235, 0
          %238 = vst.msk [vmem:[%s234 + $0x10] sm:$0x3] %vm235, 0
          %239 = vst.msk [vmem:[%s234 + $0x18] sm:$0x3] %vm235, 0
          %240 = vst.msk [vmem:[%s234 + $0x20] sm:$0x3] %vm235, 0
          %241 = vst.msk [vmem:[%s234 + $0x28] sm:$0x3] %vm235, 0
          %242 = vst.msk [vmem:[%s234 + $0x30] sm:$0x3] %vm235, 0
          %243 = vst.msk [vmem:[%s234 + $0x38] sm:$0x3] %vm235, 0
          %vm244 = vcmask 27650
          %245 = vst.msk [vmem:[%s234 + $0x4] sm:$0xc] %vm244, 0
          %246 = vst.msk [vmem:[%s234 + $0xc] sm:$0xc] %vm244, 0
          %247 = vst.msk [vmem:[%s234 + $0x14] sm:$0xc] %vm244, 0
          %248 = vst.msk [vmem:[%s234 + $0x1c] sm:$0xc] %vm244, 0
          %249 = vst.msk [vmem:[%s234 + $0x24] sm:$0xc] %vm244, 0
          %250 = vst.msk [vmem:[%s234 + $0x2c] sm:$0xc] %vm244, 0
          %251 = vst.msk [vmem:[%s234 + $0x34] sm:$0xc] %vm244, 0
          %252 = vst.msk [vmem:[%s234 + $0x3c] sm:$0xc] %vm244, 0
          %v253 = vld [vmem:[%s209] sm:$0xf]
          %v254 = vld [vmem:[%s209 + $0x4] sm:$0xf]
          %v255 = vld [vmem:[%s209 + $0x8] sm:$0xf]
          %v256 = vld [vmem:[%s209 + $0xc] sm:$0xf]
          %v257 = vld [vmem:[%s209 + $0x10] sm:$0xf]
          %v258 = vld [vmem:[%s209 + $0x14] sm:$0xf]
          %v259 = vld [vmem:[%s209 + $0x18] sm:$0xf]
          %v260 = vld [vmem:[%s209 + $0x1c] sm:$0xf]
          %v269 = vrot.slane %v253, 6
          %v270 = vrot.slane %v269, 4
          %v271 = vrot.slane %v254, 6
          %v272 = vrot.slane %v271, 4
          %v273 = vrot.slane %v255, 6
          %v274 = vrot.slane %v273, 4
          %v275 = vrot.slane %v256, 6
          %v276 = vrot.slane %v275, 4
          %v277 = vrot.slane %v257, 6
          %v278 = vrot.slane %v277, 4
          %v279 = vrot.slane %v258, 6
          %v280 = vrot.slane %v279, 4
          %v281 = vrot.slane %v259, 6
          %v282 = vrot.slane %v281, 4
          %v283 = vrot.slane %v260, 6
          %v284 = vrot.slane %v283, 4
          %301 = vst.msk [vmem:[%s234] sm:$0xc] %vm244, %v269
          %302 = vst.msk [vmem:[%s234 + $0x4] sm:$0x3] %vm235, %v270
          %303 = vst.msk [vmem:[%s234 + $0x8] sm:$0xc] %vm244, %v271
          %304 = vst.msk [vmem:[%s234 + $0xc] sm:$0x3] %vm235, %v272
          %305 = vst.msk [vmem:[%s234 + $0x10] sm:$0xc] %vm244, %v273
          %306 = vst.msk [vmem:[%s234 + $0x14] sm:$0x3] %vm235, %v274
          %307 = vst.msk [vmem:[%s234 + $0x18] sm:$0xc] %vm244, %v275
          %308 = vst.msk [vmem:[%s234 + $0x1c] sm:$0x3] %vm235, %v276
          %309 = vst.msk [vmem:[%s234 + $0x20] sm:$0xc] %vm244, %v277
          %310 = vst.msk [vmem:[%s234 + $0x24] sm:$0x3] %vm235, %v278
          %311 = vst.msk [vmem:[%s234 + $0x28] sm:$0xc] %vm244, %v279
          %312 = vst.msk [vmem:[%s234 + $0x2c] sm:$0x3] %vm235, %v280
          %313 = vst.msk [vmem:[%s234 + $0x30] sm:$0xc] %vm244, %v281
          %314 = vst.msk [vmem:[%s234 + $0x34] sm:$0x3] %vm235, %v282
          %315 = vst.msk [vmem:[%s234 + $0x38] sm:$0xc] %vm244, %v283
          %316 = vst.msk [vmem:[%s234 + $0x3c] sm:$0x3] %vm235, %v284
        $region40: #{tpu_custom_call.1} parent=35 // pred_fallthru
          _
        %s317 = smul.u32 %s23, 8
        %s318 = smul.u32 %s317, 2
        %s319 = smul.addr %s318, 4
        %s320 = scalar_lea.vmem [#allocation2], %s319
        %v321 = vld [vmem:[%s320] sm:$0xf]
        %v322 = vld [vmem:[%s320 + $0x4] sm:$0xf]
        %v323 = vld [vmem:[%s320 + $0x8] sm:$0xf]
        %v324 = vld [vmem:[%s320 + $0xc] sm:$0xf]
        %v325 = vld [vmem:[%s320 + $0x10] sm:$0xf]
        %v326 = vld [vmem:[%s320 + $0x14] sm:$0xf]
        %v327 = vld [vmem:[%s320 + $0x18] sm:$0xf]
        %v328 = vld [vmem:[%s320 + $0x1c] sm:$0xf]
        %v329 = vld [vmem:[%s320 + $0x20] sm:$0xf]
        %v330 = vld [vmem:[%s320 + $0x24] sm:$0xf]
        %v331 = vld [vmem:[%s320 + $0x28] sm:$0xf]
        %v332 = vld [vmem:[%s320 + $0x2c] sm:$0xf]
        %v333 = vld [vmem:[%s320 + $0x30] sm:$0xf]
        %v334 = vld [vmem:[%s320 + $0x34] sm:$0xf]
        %v335 = vld [vmem:[%s320 + $0x38] sm:$0xf]
        %v336 = vld [vmem:[%s320 + $0x3c] sm:$0xf]
        %s337 = sadd.s32 %s317, 1
        %s338 = smul.u32 %s337, 2
        %s339 = smul.addr %s338, 4
        %s340 = scalar_lea.vmem [#allocation2], %s339
        %v341 = vld [vmem:[%s340] sm:$0xf]
        %v342 = vld [vmem:[%s340 + $0x4] sm:$0xf]
        %v343 = vld [vmem:[%s340 + $0x8] sm:$0xf]
        %v344 = vld [vmem:[%s340 + $0xc] sm:$0xf]
        %v345 = vld [vmem:[%s340 + $0x10] sm:$0xf]
        %v346 = vld [vmem:[%s340 + $0x14] sm:$0xf]
        %v347 = vld [vmem:[%s340 + $0x18] sm:$0xf]
        %v348 = vld [vmem:[%s340 + $0x1c] sm:$0xf]
        %v349 = vld [vmem:[%s340 + $0x20] sm:$0xf]
        %v350 = vld [vmem:[%s340 + $0x24] sm:$0xf]
        %v351 = vld [vmem:[%s340 + $0x28] sm:$0xf]
        %v352 = vld [vmem:[%s340 + $0x2c] sm:$0xf]
        %v353 = vld [vmem:[%s340 + $0x30] sm:$0xf]
        %v354 = vld [vmem:[%s340 + $0x34] sm:$0xf]
        %v355 = vld [vmem:[%s340 + $0x38] sm:$0xf]
        %v356 = vld [vmem:[%s340 + $0x3c] sm:$0xf]
        %s357 = sadd.s32 %s317, 2
        %s358 = smul.u32 %s357, 2
        %s359 = smul.addr %s358, 4
        %s360 = scalar_lea.vmem [#allocation2], %s359
        %v361 = vld [vmem:[%s360] sm:$0xf]
        %v362 = vld [vmem:[%s360 + $0x4] sm:$0xf]
        %v363 = vld [vmem:[%s360 + $0x8] sm:$0xf]
        %v364 = vld [vmem:[%s360 + $0xc] sm:$0xf]
        %v365 = vld [vmem:[%s360 + $0x10] sm:$0xf]
        %v366 = vld [vmem:[%s360 + $0x14] sm:$0xf]
        %v367 = vld [vmem:[%s360 + $0x18] sm:$0xf]
        %v368 = vld [vmem:[%s360 + $0x1c] sm:$0xf]
        %v369 = vld [vmem:[%s360 + $0x20] sm:$0xf]
        %v370 = vld [vmem:[%s360 + $0x24] sm:$0xf]
        %v371 = vld [vmem:[%s360 + $0x28] sm:$0xf]
        %v372 = vld [vmem:[%s360 + $0x2c] sm:$0xf]
        %v373 = vld [vmem:[%s360 + $0x30] sm:$0xf]
        %v374 = vld [vmem:[%s360 + $0x34] sm:$0xf]
        %v375 = vld [vmem:[%s360 + $0x38] sm:$0xf]
        %v376 = vld [vmem:[%s360 + $0x3c] sm:$0xf]
        %s377 = sadd.s32 %s317, 3
        %s378 = smul.u32 %s377, 2
        %s379 = smul.addr %s378, 4
        %s380 = scalar_lea.vmem [#allocation2], %s379
        %v381 = vld [vmem:[%s380] sm:$0xf]
        %v382 = vld [vmem:[%s380 + $0x4] sm:$0xf]
        %v383 = vld [vmem:[%s380 + $0x8] sm:$0xf]
        %v384 = vld [vmem:[%s380 + $0xc] sm:$0xf]
        %v385 = vld [vmem:[%s380 + $0x10] sm:$0xf]
        %v386 = vld [vmem:[%s380 + $0x14] sm:$0xf]
        %v387 = vld [vmem:[%s380 + $0x18] sm:$0xf]
        %v388 = vld [vmem:[%s380 + $0x1c] sm:$0xf]
        %v389 = vld [vmem:[%s380 + $0x20] sm:$0xf]
        %v390 = vld [vmem:[%s380 + $0x24] sm:$0xf]
        %v391 = vld [vmem:[%s380 + $0x28] sm:$0xf]
        %v392 = vld [vmem:[%s380 + $0x2c] sm:$0xf]
        %v393 = vld [vmem:[%s380 + $0x30] sm:$0xf]
        %v394 = vld [vmem:[%s380 + $0x34] sm:$0xf]
        %v395 = vld [vmem:[%s380 + $0x38] sm:$0xf]
        %v396 = vld [vmem:[%s380 + $0x3c] sm:$0xf]
        %s397 = sadd.s32 %s317, 4
        %s398 = smul.u32 %s397, 2
        %s399 = smul.addr %s398, 4
        %s400 = scalar_lea.vmem [#allocation2], %s399
        %v401 = vld [vmem:[%s400] sm:$0xf]
        %v402 = vld [vmem:[%s400 + $0x4] sm:$0xf]
        %v403 = vld [vmem:[%s400 + $0x8] sm:$0xf]
        %v404 = vld [vmem:[%s400 + $0xc] sm:$0xf]
        %v405 = vld [vmem:[%s400 + $0x10] sm:$0xf]
        %v406 = vld [vmem:[%s400 + $0x14] sm:$0xf]
        %v407 = vld [vmem:[%s400 + $0x18] sm:$0xf]
        %v408 = vld [vmem:[%s400 + $0x1c] sm:$0xf]
        %v409 = vld [vmem:[%s400 + $0x20] sm:$0xf]
        %v410 = vld [vmem:[%s400 + $0x24] sm:$0xf]
        %v411 = vld [vmem:[%s400 + $0x28] sm:$0xf]
        %v412 = vld [vmem:[%s400 + $0x2c] sm:$0xf]
        %v413 = vld [vmem:[%s400 + $0x30] sm:$0xf]
        %v414 = vld [vmem:[%s400 + $0x34] sm:$0xf]
        %v415 = vld [vmem:[%s400 + $0x38] sm:$0xf]
        %v416 = vld [vmem:[%s400 + $0x3c] sm:$0xf]
        %s417 = sadd.s32 %s317, 5
        %s418 = smul.u32 %s417, 2
        %s419 = smul.addr %s418, 4
        %s420 = scalar_lea.vmem [#allocation2], %s419
        %v421 = vld [vmem:[%s420] sm:$0xf]
        %v422 = vld [vmem:[%s420 + $0x4] sm:$0xf]
        %v423 = vld [vmem:[%s420 + $0x8] sm:$0xf]
        %v424 = vld [vmem:[%s420 + $0xc] sm:$0xf]
        %v425 = vld [vmem:[%s420 + $0x10] sm:$0xf]
        %v426 = vld [vmem:[%s420 + $0x14] sm:$0xf]
        %v427 = vld [vmem:[%s420 + $0x18] sm:$0xf]
        %v428 = vld [vmem:[%s420 + $0x1c] sm:$0xf]
        %v429 = vld [vmem:[%s420 + $0x20] sm:$0xf]
        %v430 = vld [vmem:[%s420 + $0x24] sm:$0xf]
        %v431 = vld [vmem:[%s420 + $0x28] sm:$0xf]
        %v432 = vld [vmem:[%s420 + $0x2c] sm:$0xf]
        %v433 = vld [vmem:[%s420 + $0x30] sm:$0xf]
        %v434 = vld [vmem:[%s420 + $0x34] sm:$0xf]
        %v435 = vld [vmem:[%s420 + $0x38] sm:$0xf]
        %v436 = vld [vmem:[%s420 + $0x3c] sm:$0xf]
        %s437 = sadd.s32 %s317, 6
        %s438 = smul.u32 %s437, 2
        %s439 = smul.addr %s438, 4
        %s440 = scalar_lea.vmem [#allocation2], %s439
        %v441 = vld [vmem:[%s440] sm:$0xf]
        %v442 = vld [vmem:[%s440 + $0x4] sm:$0xf]
        %v443 = vld [vmem:[%s440 + $0x8] sm:$0xf]
        %v444 = vld [vmem:[%s440 + $0xc] sm:$0xf]
        %v445 = vld [vmem:[%s440 + $0x10] sm:$0xf]
        %v446 = vld [vmem:[%s440 + $0x14] sm:$0xf]
        %v447 = vld [vmem:[%s440 + $0x18] sm:$0xf]
        %v448 = vld [vmem:[%s440 + $0x1c] sm:$0xf]
        %v449 = vld [vmem:[%s440 + $0x20] sm:$0xf]
        %v450 = vld [vmem:[%s440 + $0x24] sm:$0xf]
        %v451 = vld [vmem:[%s440 + $0x28] sm:$0xf]
        %v452 = vld [vmem:[%s440 + $0x2c] sm:$0xf]
        %v453 = vld [vmem:[%s440 + $0x30] sm:$0xf]
        %v454 = vld [vmem:[%s440 + $0x34] sm:$0xf]
        %v455 = vld [vmem:[%s440 + $0x38] sm:$0xf]
        %v456 = vld [vmem:[%s440 + $0x3c] sm:$0xf]
        %s457 = sadd.s32 %s317, 7
        %s458 = smul.u32 %s457, 2
        %s459 = smul.addr %s458, 4
        %s460 = scalar_lea.vmem [#allocation2], %s459
        %v461 = vld [vmem:[%s460] sm:$0xf]
        %v462 = vld [vmem:[%s460 + $0x4] sm:$0xf]
        %v463 = vld [vmem:[%s460 + $0x8] sm:$0xf]
        %v464 = vld [vmem:[%s460 + $0xc] sm:$0xf]
        %v465 = vld [vmem:[%s460 + $0x10] sm:$0xf]
        %v466 = vld [vmem:[%s460 + $0x14] sm:$0xf]
        %v467 = vld [vmem:[%s460 + $0x18] sm:$0xf]
        %v468 = vld [vmem:[%s460 + $0x1c] sm:$0xf]
        %v469 = vld [vmem:[%s460 + $0x20] sm:$0xf]
        %v470 = vld [vmem:[%s460 + $0x24] sm:$0xf]
        %v471 = vld [vmem:[%s460 + $0x28] sm:$0xf]
        %v472 = vld [vmem:[%s460 + $0x2c] sm:$0xf]
        %v473 = vld [vmem:[%s460 + $0x30] sm:$0xf]
        %v474 = vld [vmem:[%s460 + $0x34] sm:$0xf]
        %v475 = vld [vmem:[%s460 + $0x38] sm:$0xf]
        %v476 = vld [vmem:[%s460 + $0x3c] sm:$0xf]
        %s477 = sadd.s32 %s317, 8
        %s478 = smul.u32 %s477, 2
        %s479 = smul.addr %s478, 4
        %s480 = scalar_lea.vmem [#allocation2], %s479
        %v481 = vld [vmem:[%s480] sm:$0xf]
        %v482 = vld [vmem:[%s480 + $0x4] sm:$0xf]
        %v483 = vld [vmem:[%s480 + $0x8] sm:$0xf]
        %v484 = vld [vmem:[%s480 + $0xc] sm:$0xf]
        %v485 = vld [vmem:[%s480 + $0x10] sm:$0xf]
        %v486 = vld [vmem:[%s480 + $0x14] sm:$0xf]
        %v487 = vld [vmem:[%s480 + $0x18] sm:$0xf]
        %v488 = vld [vmem:[%s480 + $0x1c] sm:$0xf]
        %v489 = vld [vmem:[%s480 + $0x20] sm:$0xf]
        %v490 = vld [vmem:[%s480 + $0x24] sm:$0xf]
        %v491 = vld [vmem:[%s480 + $0x28] sm:$0xf]
        %v492 = vld [vmem:[%s480 + $0x2c] sm:$0xf]
        %v493 = vld [vmem:[%s480 + $0x30] sm:$0xf]
        %v494 = vld [vmem:[%s480 + $0x34] sm:$0xf]
        %v495 = vld [vmem:[%s480 + $0x38] sm:$0xf]
        %v496 = vld [vmem:[%s480 + $0x3c] sm:$0xf]
        %v513 = vunpack.c.l.b16 %v321
        %v514 = vunpack.c.l.b16 %v322
        %v515 = vunpack.c.l.b16 %v323
        %v516 = vunpack.c.l.b16 %v324
        %v517 = vunpack.c.l.b16 %v325
        %v518 = vunpack.c.l.b16 %v326
        %v519 = vunpack.c.l.b16 %v327
        %v520 = vunpack.c.l.b16 %v328
        %v521 = vunpack.c.l.b16 %v329
        %v522 = vunpack.c.l.b16 %v330
        %v523 = vunpack.c.l.b16 %v331
        %v524 = vunpack.c.l.b16 %v332
        %v525 = vunpack.c.l.b16 %v333
        %v526 = vunpack.c.l.b16 %v334
        %v527 = vunpack.c.l.b16 %v335
        %v528 = vunpack.c.l.b16 %v336
        %v529 = vpack.c.b16 %v514, %v513
        %v530 = vpack.c.b16 %v516, %v515
        %v531 = vpack.c.b16 %v518, %v517
        %v532 = vpack.c.b16 %v520, %v519
        %v533 = vpack.c.b16 %v522, %v521
        %v534 = vpack.c.b16 %v524, %v523
        %v535 = vpack.c.b16 %v526, %v525
        %v536 = vpack.c.b16 %v528, %v527
        %v553 = vunpack.c.l.b16 %v341
        %v554 = vunpack.c.l.b16 %v342
        %v555 = vunpack.c.l.b16 %v343
        %v556 = vunpack.c.l.b16 %v344
        %v557 = vunpack.c.l.b16 %v345
        %v558 = vunpack.c.l.b16 %v346
        %v559 = vunpack.c.l.b16 %v347
        %v560 = vunpack.c.l.b16 %v348
        %v561 = vunpack.c.l.b16 %v349
        %v562 = vunpack.c.l.b16 %v350
        %v563 = vunpack.c.l.b16 %v351
        %v564 = vunpack.c.l.b16 %v352
        %v565 = vunpack.c.l.b16 %v353
        %v566 = vunpack.c.l.b16 %v354
        %v567 = vunpack.c.l.b16 %v355
        %v568 = vunpack.c.l.b16 %v356
        %v569 = vpack.c.b16 %v554, %v553
        %v570 = vpack.c.b16 %v556, %v555
        %v571 = vpack.c.b16 %v558, %v557
        %v572 = vpack.c.b16 %v560, %v559
        %v573 = vpack.c.b16 %v562, %v561
        %v574 = vpack.c.b16 %v564, %v563
        %v575 = vpack.c.b16 %v566, %v565
        %v576 = vpack.c.b16 %v568, %v567
        %577 = vrot.lane.b32.xlu0 %v569, 4
        %v578 = vpop.permute.xlu0 %577
        %579 = vrot.lane.b32.xlu0 %v570, 4
        %v580 = vpop.permute.xlu0 %579
        %581 = vrot.lane.b32.xlu0 %v571, 4
        %v582 = vpop.permute.xlu0 %581
        %583 = vrot.lane.b32.xlu0 %v572, 4
        %v584 = vpop.permute.xlu0 %583
        %585 = vrot.lane.b32.xlu0 %v573, 4
        %v586 = vpop.permute.xlu0 %585
        %587 = vrot.lane.b32.xlu0 %v574, 4
        %v588 = vpop.permute.xlu0 %587
        %589 = vrot.lane.b32.xlu0 %v575, 4
        %v590 = vpop.permute.xlu0 %589
        %591 = vrot.lane.b32.xlu0 %v576, 4
        %v592 = vpop.permute.xlu0 %591
        %v609 = vunpack.c.l.b16 %v361
        %v610 = vunpack.c.l.b16 %v362
        %v611 = vunpack.c.l.b16 %v363
        %v612 = vunpack.c.l.b16 %v364
        %v613 = vunpack.c.l.b16 %v365
        %v614 = vunpack.c.l.b16 %v366
        %v615 = vunpack.c.l.b16 %v367
        %v616 = vunpack.c.l.b16 %v368
        %v617 = vunpack.c.l.b16 %v369
        %v618 = vunpack.c.l.b16 %v370
        %v619 = vunpack.c.l.b16 %v371
        %v620 = vunpack.c.l.b16 %v372
        %v621 = vunpack.c.l.b16 %v373
        %v622 = vunpack.c.l.b16 %v374
        %v623 = vunpack.c.l.b16 %v375
        %v624 = vunpack.c.l.b16 %v376
        %v625 = vpack.c.b16 %v610, %v609
        %v626 = vpack.c.b16 %v612, %v611
        %v627 = vpack.c.b16 %v614, %v613
        %v628 = vpack.c.b16 %v616, %v615
        %v629 = vpack.c.b16 %v618, %v617
        %v630 = vpack.c.b16 %v620, %v619
        %v631 = vpack.c.b16 %v622, %v621
        %v632 = vpack.c.b16 %v624, %v623
        %633 = vrot.lane.b32.xlu0 %v625, 8
        %v634 = vpop.permute.xlu0 %633
        %635 = vrot.lane.b32.xlu0 %v626, 8
        %v636 = vpop.permute.xlu0 %635
        %637 = vrot.lane.b32.xlu0 %v627, 8
        %v638 = vpop.permute.xlu0 %637
        %639 = vrot.lane.b32.xlu0 %v628, 8
        %v640 = vpop.permute.xlu0 %639
        %641 = vrot.lane.b32.xlu0 %v629, 8
        %v642 = vpop.permute.xlu0 %641
        %643 = vrot.lane.b32.xlu0 %v630, 8
        %v644 = vpop.permute.xlu0 %643
        %645 = vrot.lane.b32.xlu0 %v631, 8
        %v646 = vpop.permute.xlu0 %645
        %647 = vrot.lane.b32.xlu0 %v632, 8
        %v648 = vpop.permute.xlu0 %647
        %v665 = vunpack.c.l.b16 %v381
        %v666 = vunpack.c.l.b16 %v382
        %v667 = vunpack.c.l.b16 %v383
        %v668 = vunpack.c.l.b16 %v384
        %v669 = vunpack.c.l.b16 %v385
        %v670 = vunpack.c.l.b16 %v386
        %v671 = vunpack.c.l.b16 %v387
        %v672 = vunpack.c.l.b16 %v388
        %v673 = vunpack.c.l.b16 %v389
        %v674 = vunpack.c.l.b16 %v390
        %v675 = vunpack.c.l.b16 %v391
        %v676 = vunpack.c.l.b16 %v392
        %v677 = vunpack.c.l.b16 %v393
        %v678 = vunpack.c.l.b16 %v394
        %v679 = vunpack.c.l.b16 %v395
        %v680 = vunpack.c.l.b16 %v396
        %v681 = vpack.c.b16 %v666, %v665
        %v682 = vpack.c.b16 %v668, %v667
        %v683 = vpack.c.b16 %v670, %v669
        %v684 = vpack.c.b16 %v672, %v671
        %v685 = vpack.c.b16 %v674, %v673
        %v686 = vpack.c.b16 %v676, %v675
        %v687 = vpack.c.b16 %v678, %v677
        %v688 = vpack.c.b16 %v680, %v679
        %689 = vrot.lane.b32.xlu0 %v681, 12
        %v690 = vpop.permute.xlu0 %689
        %691 = vrot.lane.b32.xlu0 %v682, 12
        %v692 = vpop.permute.xlu0 %691
        %693 = vrot.lane.b32.xlu0 %v683, 12
        %v694 = vpop.permute.xlu0 %693
        %695 = vrot.lane.b32.xlu0 %v684, 12
        %v696 = vpop.permute.xlu0 %695
        %697 = vrot.lane.b32.xlu0 %v685, 12
        %v698 = vpop.permute.xlu0 %697
        %699 = vrot.lane.b32.xlu0 %v686, 12
        %v700 = vpop.permute.xlu0 %699
        %701 = vrot.lane.b32.xlu0 %v687, 12
        %v702 = vpop.permute.xlu0 %701
        %703 = vrot.lane.b32.xlu0 %v688, 12
        %v704 = vpop.permute.xlu0 %703
        %v721 = vunpack.c.l.b16 %v401
        %v722 = vunpack.c.l.b16 %v402
        %v723 = vunpack.c.l.b16 %v403
        %v724 = vunpack.c.l.b16 %v404
        %v725 = vunpack.c.l.b16 %v405
        %v726 = vunpack.c.l.b16 %v406
        %v727 = vunpack.c.l.b16 %v407
        %v728 = vunpack.c.l.b16 %v408
        %v729 = vunpack.c.l.b16 %v409
        %v730 = vunpack.c.l.b16 %v410
        %v731 = vunpack.c.l.b16 %v411
        %v732 = vunpack.c.l.b16 %v412
        %v733 = vunpack.c.l.b16 %v413
        %v734 = vunpack.c.l.b16 %v414
        %v735 = vunpack.c.l.b16 %v415
        %v736 = vunpack.c.l.b16 %v416
        %v737 = vpack.c.b16 %v722, %v721
        %v738 = vpack.c.b16 %v724, %v723
        %v739 = vpack.c.b16 %v726, %v725
        %v740 = vpack.c.b16 %v728, %v727
        %v741 = vpack.c.b16 %v730, %v729
        %v742 = vpack.c.b16 %v732, %v731
        %v743 = vpack.c.b16 %v734, %v733
        %v744 = vpack.c.b16 %v736, %v735
        %745 = vrot.lane.b32.xlu0 %v737, 16
        %v746 = vpop.permute.xlu0 %745
        %747 = vrot.lane.b32.xlu0 %v738, 16
        %v748 = vpop.permute.xlu0 %747
        %749 = vrot.lane.b32.xlu0 %v739, 16
        %v750 = vpop.permute.xlu0 %749
        %751 = vrot.lane.b32.xlu0 %v740, 16
        %v752 = vpop.permute.xlu0 %751
        %753 = vrot.lane.b32.xlu0 %v741, 16
        %v754 = vpop.permute.xlu0 %753
        %755 = vrot.lane.b32.xlu0 %v742, 16
        %v756 = vpop.permute.xlu0 %755
        %757 = vrot.lane.b32.xlu0 %v743, 16
        %v758 = vpop.permute.xlu0 %757
        %759 = vrot.lane.b32.xlu0 %v744, 16
        %v760 = vpop.permute.xlu0 %759
        %v777 = vunpack.c.l.b16 %v421
        %v778 = vunpack.c.l.b16 %v422
        %v779 = vunpack.c.l.b16 %v423
        %v780 = vunpack.c.l.b16 %v424
        %v781 = vunpack.c.l.b16 %v425
        %v782 = vunpack.c.l.b16 %v426
        %v783 = vunpack.c.l.b16 %v427
        %v784 = vunpack.c.l.b16 %v428
        %v785 = vunpack.c.l.b16 %v429
        %v786 = vunpack.c.l.b16 %v430
        %v787 = vunpack.c.l.b16 %v431
        %v788 = vunpack.c.l.b16 %v432
        %v789 = vunpack.c.l.b16 %v433
        %v790 = vunpack.c.l.b16 %v434
        %v791 = vunpack.c.l.b16 %v435
        %v792 = vunpack.c.l.b16 %v436
        %v793 = vpack.c.b16 %v778, %v777
        %v794 = vpack.c.b16 %v780, %v779
        %v795 = vpack.c.b16 %v782, %v781
        %v796 = vpack.c.b16 %v784, %v783
        %v797 = vpack.c.b16 %v786, %v785
        %v798 = vpack.c.b16 %v788, %v787
        %v799 = vpack.c.b16 %v790, %v789
        %v800 = vpack.c.b16 %v792, %v791
        %801 = vrot.lane.b32.xlu0 %v793, 20
        %v802 = vpop.permute.xlu0 %801
        %803 = vrot.lane.b32.xlu0 %v794, 20
        %v804 = vpop.permute.xlu0 %803
        %805 = vrot.lane.b32.xlu0 %v795, 20
        %v806 = vpop.permute.xlu0 %805
        %807 = vrot.lane.b32.xlu0 %v796, 20
        %v808 = vpop.permute.xlu0 %807
        %809 = vrot.lane.b32.xlu0 %v797, 20
        %v810 = vpop.permute.xlu0 %809
        %811 = vrot.lane.b32.xlu0 %v798, 20
        %v812 = vpop.permute.xlu0 %811
        %813 = vrot.lane.b32.xlu0 %v799, 20
        %v814 = vpop.permute.xlu0 %813
        %815 = vrot.lane.b32.xlu0 %v800, 20
        %v816 = vpop.permute.xlu0 %815
        %v833 = vunpack.c.l.b16 %v441
        %v834 = vunpack.c.l.b16 %v442
        %v835 = vunpack.c.l.b16 %v443
        %v836 = vunpack.c.l.b16 %v444
        %v837 = vunpack.c.l.b16 %v445
        %v838 = vunpack.c.l.b16 %v446
        %v839 = vunpack.c.l.b16 %v447
        %v840 = vunpack.c.l.b16 %v448
        %v841 = vunpack.c.l.b16 %v449
        %v842 = vunpack.c.l.b16 %v450
        %v843 = vunpack.c.l.b16 %v451
        %v844 = vunpack.c.l.b16 %v452
        %v845 = vunpack.c.l.b16 %v453
        %v846 = vunpack.c.l.b16 %v454
        %v847 = vunpack.c.l.b16 %v455
        %v848 = vunpack.c.l.b16 %v456
        %v849 = vpack.c.b16 %v834, %v833
        %v850 = vpack.c.b16 %v836, %v835
        %v851 = vpack.c.b16 %v838, %v837
        %v852 = vpack.c.b16 %v840, %v839
        %v853 = vpack.c.b16 %v842, %v841
        %v854 = vpack.c.b16 %v844, %v843
        %v855 = vpack.c.b16 %v846, %v845
        %v856 = vpack.c.b16 %v848, %v847
        %857 = vrot.lane.b32.xlu0 %v849, 24
        %v858 = vpop.permute.xlu0 %857
        %859 = vrot.lane.b32.xlu0 %v850, 24
        %v860 = vpop.permute.xlu0 %859
        %861 = vrot.lane.b32.xlu0 %v851, 24
        %v862 = vpop.permute.xlu0 %861
        %863 = vrot.lane.b32.xlu0 %v852, 24
        %v864 = vpop.permute.xlu0 %863
        %865 = vrot.lane.b32.xlu0 %v853, 24
        %v866 = vpop.permute.xlu0 %865
        %867 = vrot.lane.b32.xlu0 %v854, 24
        %v868 = vpop.permute.xlu0 %867
        %869 = vrot.lane.b32.xlu0 %v855, 24
        %v870 = vpop.permute.xlu0 %869
        %871 = vrot.lane.b32.xlu0 %v856, 24
        %v872 = vpop.permute.xlu0 %871
        %v889 = vunpack.c.l.b16 %v461
        %v890 = vunpack.c.l.b16 %v462
        %v891 = vunpack.c.l.b16 %v463
        %v892 = vunpack.c.l.b16 %v464
        %v893 = vunpack.c.l.b16 %v465
        %v894 = vunpack.c.l.b16 %v466
        %v895 = vunpack.c.l.b16 %v467
        %v896 = vunpack.c.l.b16 %v468
        %v897 = vunpack.c.l.b16 %v469
        %v898 = vunpack.c.l.b16 %v470
        %v899 = vunpack.c.l.b16 %v471
        %v900 = vunpack.c.l.b16 %v472
        %v901 = vunpack.c.l.b16 %v473
        %v902 = vunpack.c.l.b16 %v474
        %v903 = vunpack.c.l.b16 %v475
        %v904 = vunpack.c.l.b16 %v476
        %v905 = vpack.c.b16 %v890, %v889
        %v906 = vpack.c.b16 %v892, %v891
        %v907 = vpack.c.b16 %v894, %v893
        %v908 = vpack.c.b16 %v896, %v895
        %v909 = vpack.c.b16 %v898, %v897
        %v910 = vpack.c.b16 %v900, %v899
        %v911 = vpack.c.b16 %v902, %v901
        %v912 = vpack.c.b16 %v904, %v903
        %913 = vrot.lane.b32.xlu0 %v905, 28
        %v914 = vpop.permute.xlu0 %913
        %915 = vrot.lane.b32.xlu0 %v906, 28
        %v916 = vpop.permute.xlu0 %915
        %917 = vrot.lane.b32.xlu0 %v907, 28
        %v918 = vpop.permute.xlu0 %917
        %919 = vrot.lane.b32.xlu0 %v908, 28
        %v920 = vpop.permute.xlu0 %919
        %921 = vrot.lane.b32.xlu0 %v909, 28
        %v922 = vpop.permute.xlu0 %921
        %923 = vrot.lane.b32.xlu0 %v910, 28
        %v924 = vpop.permute.xlu0 %923
        %925 = vrot.lane.b32.xlu0 %v911, 28
        %v926 = vpop.permute.xlu0 %925
        %927 = vrot.lane.b32.xlu0 %v912, 28
        %v928 = vpop.permute.xlu0 %927
        %v945 = vunpack.c.l.b16 %v481
        %v946 = vunpack.c.l.b16 %v482
        %v947 = vunpack.c.l.b16 %v483
        %v948 = vunpack.c.l.b16 %v484
        %v949 = vunpack.c.l.b16 %v485
        %v950 = vunpack.c.l.b16 %v486
        %v951 = vunpack.c.l.b16 %v487
        %v952 = vunpack.c.l.b16 %v488
        %v953 = vunpack.c.l.b16 %v489
        %v954 = vunpack.c.l.b16 %v490
        %v955 = vunpack.c.l.b16 %v491
        %v956 = vunpack.c.l.b16 %v492
        %v957 = vunpack.c.l.b16 %v493
        %v958 = vunpack.c.l.b16 %v494
        %v959 = vunpack.c.l.b16 %v495
        %v960 = vunpack.c.l.b16 %v496
        %v961 = vpack.c.b16 %v946, %v945
        %v962 = vpack.c.b16 %v948, %v947
        %v963 = vpack.c.b16 %v950, %v949
        %v964 = vpack.c.b16 %v952, %v951
        %v965 = vpack.c.b16 %v954, %v953
        %v966 = vpack.c.b16 %v956, %v955
        %v967 = vpack.c.b16 %v958, %v957
        %v968 = vpack.c.b16 %v960, %v959
        %969 = vrot.lane.b32.xlu0 %v961, 32
        %v970 = vpop.permute.xlu0 %969
        %971 = vrot.lane.b32.xlu0 %v962, 32
        %v972 = vpop.permute.xlu0 %971
        %973 = vrot.lane.b32.xlu0 %v963, 32
        %v974 = vpop.permute.xlu0 %973
        %975 = vrot.lane.b32.xlu0 %v964, 32
        %v976 = vpop.permute.xlu0 %975
        %977 = vrot.lane.b32.xlu0 %v965, 32
        %v978 = vpop.permute.xlu0 %977
        %979 = vrot.lane.b32.xlu0 %v966, 32
        %v980 = vpop.permute.xlu0 %979
        %981 = vrot.lane.b32.xlu0 %v967, 32
        %v982 = vpop.permute.xlu0 %981
        %983 = vrot.lane.b32.xlu0 %v968, 32
        %v984 = vpop.permute.xlu0 %983
        %vm985 = vcmask 31744
        %v988 = vsel %vm985, %v529, %v578
        %v991 = vsel %vm985, %v530, %v580
        %v994 = vsel %vm985, %v531, %v582
        %v997 = vsel %vm985, %v532, %v584
        %v1000 = vsel %vm985, %v533, %v586
        %v1003 = vsel %vm985, %v534, %v588
        %v1006 = vsel %vm985, %v535, %v590
        %v1009 = vsel %vm985, %v536, %v592
        %vm1010 = vcmask 64512
        %v1012 = vsel %vm1010, %v988, %v634
        %v1014 = vsel %vm1010, %v991, %v636
        %v1016 = vsel %vm1010, %v994, %v638
        %v1018 = vsel %vm1010, %v997, %v640
        %v1020 = vsel %vm1010, %v1000, %v642
        %v1022 = vsel %vm1010, %v1003, %v644
        %v1024 = vsel %vm1010, %v1006, %v646
        %v1026 = vsel %vm1010, %v1009, %v648
        %vm1027 = vcmask 97280
        %v1029 = vsel %vm1027, %v1012, %v690
        %v1031 = vsel %vm1027, %v1014, %v692
        %v1033 = vsel %vm1027, %v1016, %v694
        %v1035 = vsel %vm1027, %v1018, %v696
        %v1037 = vsel %vm1027, %v1020, %v698
        %v1039 = vsel %vm1027, %v1022, %v700
        %v1041 = vsel %vm1027, %v1024, %v702
        %v1043 = vsel %vm1027, %v1026, %v704
        %vm1044 = vcmask 130048
        %v1046 = vsel %vm1044, %v1029, %v746
        %v1048 = vsel %vm1044, %v1031, %v748
        %v1050 = vsel %vm1044, %v1033, %v750
        %v1052 = vsel %vm1044, %v1035, %v752
        %v1054 = vsel %vm1044, %v1037, %v754
        %v1056 = vsel %vm1044, %v1039, %v756
        %v1058 = vsel %vm1044, %v1041, %v758
        %v1060 = vsel %vm1044, %v1043, %v760
        %vm1061 = vcmask 162816
        %v1063 = vsel %vm1061, %v1046, %v802
        %v1065 = vsel %vm1061, %v1048, %v804
        %v1067 = vsel %vm1061, %v1050, %v806
        %v1069 = vsel %vm1061, %v1052, %v808
        %v1071 = vsel %vm1061, %v1054, %v810
        %v1073 = vsel %vm1061, %v1056, %v812
        %v1075 = vsel %vm1061, %v1058, %v814
        %v1077 = vsel %vm1061, %v1060, %v816
        %vm1078 = vcmask 195584
        %v1080 = vsel %vm1078, %v1063, %v858
        %v1082 = vsel %vm1078, %v1065, %v860
        %v1084 = vsel %vm1078, %v1067, %v862
        %v1086 = vsel %vm1078, %v1069, %v864
        %v1088 = vsel %vm1078, %v1071, %v866
        %v1090 = vsel %vm1078, %v1073, %v868
        %v1092 = vsel %vm1078, %v1075, %v870
        %v1094 = vsel %vm1078, %v1077, %v872
        %vm1095 = vcmask 228352
        %v1097 = vsel %vm1095, %v1080, %v914
        %v1099 = vsel %vm1095, %v1082, %v916
        %v1101 = vsel %vm1095, %v1084, %v918
        %v1103 = vsel %vm1095, %v1086, %v920
        %v1105 = vsel %vm1095, %v1088, %v922
        %v1107 = vsel %vm1095, %v1090, %v924
        %v1109 = vsel %vm1095, %v1092, %v926
        %v1111 = vsel %vm1095, %v1094, %v928
        %vm1112 = vcmask 261120
        %v1114 = vsel %vm1112, %v1097, %v970
        %v1116 = vsel %vm1112, %v1099, %v972
        %v1118 = vsel %vm1112, %v1101, %v974
        %v1120 = vsel %vm1112, %v1103, %v976
        %v1122 = vsel %vm1112, %v1105, %v978
        %v1124 = vsel %vm1112, %v1107, %v980
        %v1126 = vsel %vm1112, %v1109, %v982
        %v1128 = vsel %vm1112, %v1111, %v984
        %v1129 = vld [vmem:[%s1] sm:$0xff]
        %v1130 = vld [vmem:[%s1 + $0x8] sm:$0xf]
        %v1131 = vld [vmem:[%s1 + $0xc] sm:$0xff]
        %v1132 = vld [vmem:[%s1 + $0x14] sm:$0xf]
        %v1133 = vld [vmem:[%s1 + $0x18] sm:$0xff]
        %v1134 = vld [vmem:[%s1 + $0x20] sm:$0xf]
        %v1135 = vld [vmem:[%s1 + $0x24] sm:$0xff]
        %v1136 = vld [vmem:[%s1 + $0x2c] sm:$0xf]
        %v1137 = vld [vmem:[%s1 + $0x30] sm:$0x33]
        %v1138 = vld [vmem:[%s1 + $0x38] sm:$0x3]
        %v1149 = vunpack.c.l.b16 %v1129
        %v1150 = vunpack.c.h.b16 %v1129
        %v1151 = vunpack.c.l.b16 %v1130
        %v1152 = vunpack.c.l.b16 %v1131
        %v1153 = vunpack.c.h.b16 %v1131
        %v1154 = vunpack.c.l.b16 %v1132
        %v1155 = vunpack.c.l.b16 %v1133
        %v1156 = vunpack.c.h.b16 %v1133
        %v1157 = vunpack.c.l.b16 %v1134
        %v1158 = vunpack.c.l.b16 %v1135
        %v1159 = vunpack.c.h.b16 %v1135
        %v1160 = vunpack.c.l.b16 %v1136
        %v1161 = vunpack.c.l.b16 %v1137
        %v1162 = vunpack.c.h.b16 %v1137
        %v1163 = vunpack.c.l.b16 %v1138
        %v1164 = vpack.c.b16 %v1152, %v1149
        %v1165 = vpack.c.b16 %v1153, %v1150
        %v1166 = vpack.c.b16 %v1154, %v1151
        %v1167 = vpack.c.b16 %v1158, %v1155
        %v1168 = vpack.c.b16 %v1159, %v1156
        %v1169 = vpack.c.b16 %v1160, %v1157
        %v1170 = vpack.c.b16 %v1161, %v1161
        %v1171 = vpack.c.b16 %v1162, %v1162
        %v1172 = vpack.c.b16 %v1163, %v1163
        %vm1179 = vcmask 293888
        %v1180 = vsel %vm1179, %v1114, 0
        %v1182 = vsel %vm1179, %v1116, 0
        %v1184 = vsel %vm1179, %v1118, 0
        %v1186 = vsel %vm1179, %v1120, 0
        %v1188 = vsel %vm1179, %v1122, 0
        %v1190 = vsel %vm1179, %v1124, 0
        %v1192 = vsel %vm1179, %v1126, 0
        %v1194 = vsel %vm1179, %v1128, 0
        %vm1196 = vcmask 1041408
        %v1198 = vsel %vm1196, %v1170, 0
        %v1201 = vsel %vm1196, %v1171, 0
        %v1204 = vsel %vm1196, %v1172, 0
        %1206 = vmatpush.bf16.msra.mxu0 0
        %1207 = vmatpush.bf16.msra.mxu0 0
        %1208 = vmatpush.bf16.msra.mxu0 0
        %1209 = vmatpush.bf16.msra.mxu0 0
        %1210 = vmatpush.bf16.msra.mxu0 0
        %1211 = vmatpush.bf16.msra.mxu0 %v1198
        %1212 = vmatpush.bf16.msra.mxu0 %v1167
        %1213 = vmatpush.bf16.msra.mxu0 %v1164
        %1214 = vmatmul.bf16.gmra.mxu0 %v1180
        %v1215 = vpop.f32.mrf.mxu0
        %v1216 = vadd.f32 0.0, %v1215
        %v1217 = vpop.f32.mrf.mxu0
        %v1218 = vadd.f32 0.0, %v1217
        %1219 = vmatmul.bf16.gmra.mxu0 %v1182
        %v1220 = vpop.f32.mrf.mxu0
        %v1221 = vadd.f32 0.0, %v1220
        %v1222 = vpop.f32.mrf.mxu0
        %v1223 = vadd.f32 0.0, %v1222
        %1224 = vmatmul.bf16.gmra.mxu0 %v1184
        %v1225 = vpop.f32.mrf.mxu0
        %v1226 = vadd.f32 0.0, %v1225
        %v1227 = vpop.f32.mrf.mxu0
        %v1228 = vadd.f32 0.0, %v1227
        %1229 = vmatmul.bf16.gmra.mxu0 %v1186
        %v1230 = vpop.f32.mrf.mxu0
        %v1231 = vadd.f32 0.0, %v1230
        %v1232 = vpop.f32.mrf.mxu0
        %v1233 = vadd.f32 0.0, %v1232
        %1234 = vmatmul.bf16.gmra.mxu0 %v1188
        %v1235 = vpop.f32.mrf.mxu0
        %v1236 = vadd.f32 0.0, %v1235
        %v1237 = vpop.f32.mrf.mxu0
        %v1238 = vadd.f32 0.0, %v1237
        %1239 = vmatmul.bf16.gmra.mxu0 %v1190
        %v1240 = vpop.f32.mrf.mxu0
        %v1241 = vadd.f32 0.0, %v1240
        %v1242 = vpop.f32.mrf.mxu0
        %v1243 = vadd.f32 0.0, %v1242
        %1244 = vmatmul.bf16.gmra.mxu0 %v1192
        %v1245 = vpop.f32.mrf.mxu0
        %v1246 = vadd.f32 0.0, %v1245
        %v1247 = vpop.f32.mrf.mxu0
        %v1248 = vadd.f32 0.0, %v1247
        %1249 = vmatmul.bf16.gmra.mxu0 %v1194
        %v1250 = vpop.f32.mrf.mxu0
        %v1251 = vadd.f32 0.0, %v1250
        %v1252 = vpop.f32.mrf.mxu0
        %v1253 = vadd.f32 0.0, %v1252
        %1254 = vdwg.mxu0
        %1255 = vmatpush.bf16.msra.mxu0 0
        %1256 = vmatpush.bf16.msra.mxu0 0
        %1257 = vmatpush.bf16.msra.mxu0 0
        %1258 = vmatpush.bf16.msra.mxu0 0
        %1259 = vmatpush.bf16.msra.mxu0 0
        %1260 = vmatpush.bf16.msra.mxu0 %v1201
        %1261 = vmatpush.bf16.msra.mxu0 %v1168
        %1262 = vmatpush.bf16.msra.mxu0 %v1165
        %1263 = vmatmul.bf16.gmra.mxu0 %v1180
        %v1264 = vpop.f32.mrf.mxu0
        %v1265 = vadd.f32 0.0, %v1264
        %v1266 = vpop.f32.mrf.mxu0
        %v1267 = vadd.f32 0.0, %v1266
        %1268 = vmatmul.bf16.gmra.mxu0 %v1182
        %v1269 = vpop.f32.mrf.mxu0
        %v1270 = vadd.f32 0.0, %v1269
        %v1271 = vpop.f32.mrf.mxu0
        %v1272 = vadd.f32 0.0, %v1271
        %1273 = vmatmul.bf16.gmra.mxu0 %v1184
        %v1274 = vpop.f32.mrf.mxu0
        %v1275 = vadd.f32 0.0, %v1274
        %v1276 = vpop.f32.mrf.mxu0
        %v1277 = vadd.f32 0.0, %v1276
        %1278 = vmatmul.bf16.gmra.mxu0 %v1186
        %v1279 = vpop.f32.mrf.mxu0
        %v1280 = vadd.f32 0.0, %v1279
        %v1281 = vpop.f32.mrf.mxu0
        %v1282 = vadd.f32 0.0, %v1281
        %1283 = vmatmul.bf16.gmra.mxu0 %v1188
        %v1284 = vpop.f32.mrf.mxu0
        %v1285 = vadd.f32 0.0, %v1284
        %v1286 = vpop.f32.mrf.mxu0
        %v1287 = vadd.f32 0.0, %v1286
        %1288 = vmatmul.bf16.gmra.mxu0 %v1190
        %v1289 = vpop.f32.mrf.mxu0
        %v1290 = vadd.f32 0.0, %v1289
        %v1291 = vpop.f32.mrf.mxu0
        %v1292 = vadd.f32 0.0, %v1291
        %1293 = vmatmul.bf16.gmra.mxu0 %v1192
        %v1294 = vpop.f32.mrf.mxu0
        %v1295 = vadd.f32 0.0, %v1294
        %v1296 = vpop.f32.mrf.mxu0
        %v1297 = vadd.f32 0.0, %v1296
        %1298 = vmatmul.bf16.gmra.mxu0 %v1194
        %v1299 = vpop.f32.mrf.mxu0
        %v1300 = vadd.f32 0.0, %v1299
        %v1301 = vpop.f32.mrf.mxu0
        %v1302 = vadd.f32 0.0, %v1301
        %1303 = vdwg.mxu0
        %1304 = vmatpush.bf16.msra.mxu0 0
        %1305 = vmatpush.bf16.msra.mxu0 0
        %1306 = vmatpush.bf16.msra.mxu0 0
        %1307 = vmatpush.bf16.msra.mxu0 0
        %1308 = vmatpush.bf16.msra.mxu0 0
        %1309 = vmatpush.bf16.msra.mxu0 %v1204
        %1310 = vmatpush.bf16.msra.mxu0 %v1169
        %1311 = vmatpush.bf16.msra.mxu0 %v1166
        %1312 = vmatmul.bf16.gmra.mxu0 %v1180
        %v1313 = vpop.f32.mrf.mxu0
        %v1314 = vpop.f32.mrf.mxu0
        %v1315 = vadd.f32 0.0, %v1314
        %1316 = vmatmul.bf16.gmra.mxu0 %v1182
        %v1317 = vpop.f32.mrf.mxu0
        %v1318 = vpop.f32.mrf.mxu0
        %v1319 = vadd.f32 0.0, %v1318
        %1320 = vmatmul.bf16.gmra.mxu0 %v1184
        %v1321 = vpop.f32.mrf.mxu0
        %v1322 = vpop.f32.mrf.mxu0
        %v1323 = vadd.f32 0.0, %v1322
        %1324 = vmatmul.bf16.gmra.mxu0 %v1186
        %v1325 = vpop.f32.mrf.mxu0
        %v1326 = vpop.f32.mrf.mxu0
        %v1327 = vadd.f32 0.0, %v1326
        %1328 = vmatmul.bf16.gmra.mxu0 %v1188
        %v1329 = vpop.f32.mrf.mxu0
        %v1330 = vpop.f32.mrf.mxu0
        %v1331 = vadd.f32 0.0, %v1330
        %1332 = vmatmul.bf16.gmra.mxu0 %v1190
        %v1333 = vpop.f32.mrf.mxu0
        %v1334 = vpop.f32.mrf.mxu0
        %v1335 = vadd.f32 0.0, %v1334
        %1336 = vmatmul.bf16.gmra.mxu0 %v1192
        %v1337 = vpop.f32.mrf.mxu0
        %v1338 = vpop.f32.mrf.mxu0
        %v1339 = vadd.f32 0.0, %v1338
        %1340 = vmatmul.bf16.gmra.mxu0 %v1194
        %v1341 = vpop.f32.mrf.mxu0
        %v1342 = vpop.f32.mrf.mxu0
        %v1343 = vadd.f32 0.0, %v1342
        %1344 = vdwg.mxu0
        %vm1361 = vcmask 1046528
        %v1362 = vrot.slane %v1216, 1
        %v1363 = vrot.slane %v1218, 1
        %v1364 = vsel %vm1361, %v1362, %v1363
        %v1365 = vrot.slane %v1221, 1
        %v1366 = vrot.slane %v1223, 1
        %v1367 = vsel %vm1361, %v1365, %v1366
        %v1368 = vrot.slane %v1226, 1
        %v1369 = vrot.slane %v1228, 1
        %v1370 = vsel %vm1361, %v1368, %v1369
        %v1371 = vrot.slane %v1231, 1
        %v1372 = vrot.slane %v1233, 1
        %v1373 = vsel %vm1361, %v1371, %v1372
        %v1374 = vrot.slane %v1236, 1
        %v1375 = vrot.slane %v1238, 1
        %v1376 = vsel %vm1361, %v1374, %v1375
        %v1377 = vrot.slane %v1241, 1
        %v1378 = vrot.slane %v1243, 1
        %v1379 = vsel %vm1361, %v1377, %v1378
        %v1380 = vrot.slane %v1246, 1
        %v1381 = vrot.slane %v1248, 1
        %v1382 = vsel %vm1361, %v1380, %v1381
        %v1383 = vrot.slane %v1251, 1
        %v1384 = vrot.slane %v1253, 1
        %v1385 = vsel %vm1361, %v1383, %v1384
        %1386 = vrot.lane.b32.xlu0 %v1364, 96
        %v1387 = vpop.permute.xlu0 %1386
        %1388 = vrot.lane.b32.xlu0 %v1367, 96
        %v1389 = vpop.permute.xlu0 %1388
        %1390 = vrot.lane.b32.xlu0 %v1370, 96
        %v1391 = vpop.permute.xlu0 %1390
        %1392 = vrot.lane.b32.xlu0 %v1373, 96
        %v1393 = vpop.permute.xlu0 %1392
        %1394 = vrot.lane.b32.xlu0 %v1376, 96
        %v1395 = vpop.permute.xlu0 %1394
        %1396 = vrot.lane.b32.xlu0 %v1379, 96
        %v1397 = vpop.permute.xlu0 %1396
        %1398 = vrot.lane.b32.xlu0 %v1382, 96
        %v1399 = vpop.permute.xlu0 %1398
        %1400 = vrot.lane.b32.xlu0 %v1385, 96
        %v1401 = vpop.permute.xlu0 %1400
        %v1410 = vadd.f32 %v1216, %v1387
        %v1411 = vadd.f32 %v1221, %v1389
        %v1412 = vadd.f32 %v1226, %v1391
        %v1413 = vadd.f32 %v1231, %v1393
        %v1414 = vadd.f32 %v1236, %v1395
        %v1415 = vadd.f32 %v1241, %v1397
        %v1416 = vadd.f32 %v1246, %v1399
        %v1417 = vadd.f32 %v1251, %v1401
        %vm1418 = vcmask 1045504
        %v1419 = vrot.slane %v1216, 2
        %v1420 = vrot.slane %v1218, 2
        %v1421 = vsel %vm1418, %v1419, %v1420
        %v1422 = vrot.slane %v1221, 2
        %v1423 = vrot.slane %v1223, 2
        %v1424 = vsel %vm1418, %v1422, %v1423
        %v1425 = vrot.slane %v1226, 2
        %v1426 = vrot.slane %v1228, 2
        %v1427 = vsel %vm1418, %v1425, %v1426
        %v1428 = vrot.slane %v1231, 2
        %v1429 = vrot.slane %v1233, 2
        %v1430 = vsel %vm1418, %v1428, %v1429
        %v1431 = vrot.slane %v1236, 2
        %v1432 = vrot.slane %v1238, 2
        %v1433 = vsel %vm1418, %v1431, %v1432
        %v1434 = vrot.slane %v1241, 2
        %v1435 = vrot.slane %v1243, 2
        %v1436 = vsel %vm1418, %v1434, %v1435
        %v1437 = vrot.slane %v1246, 2
        %v1438 = vrot.slane %v1248, 2
        %v1439 = vsel %vm1418, %v1437, %v1438
        %v1440 = vrot.slane %v1251, 2
        %v1441 = vrot.slane %v1253, 2
        %v1442 = vsel %vm1418, %v1440, %v1441
        %1443 = vrot.lane.b32.xlu0 %v1421, 64
        %v1444 = vpop.permute.xlu0 %1443
        %1445 = vrot.lane.b32.xlu0 %v1424, 64
        %v1446 = vpop.permute.xlu0 %1445
        %1447 = vrot.lane.b32.xlu0 %v1427, 64
        %v1448 = vpop.permute.xlu0 %1447
        %1449 = vrot.lane.b32.xlu0 %v1430, 64
        %v1450 = vpop.permute.xlu0 %1449
        %1451 = vrot.lane.b32.xlu0 %v1433, 64
        %v1452 = vpop.permute.xlu0 %1451
        %1453 = vrot.lane.b32.xlu0 %v1436, 64
        %v1454 = vpop.permute.xlu0 %1453
        %1455 = vrot.lane.b32.xlu0 %v1439, 64
        %v1456 = vpop.permute.xlu0 %1455
        %1457 = vrot.lane.b32.xlu0 %v1442, 64
        %v1458 = vpop.permute.xlu0 %1457
        %v1467 = vadd.f32 %v1410, %v1444
        %v1468 = vadd.f32 %v1411, %v1446
        %v1469 = vadd.f32 %v1412, %v1448
        %v1470 = vadd.f32 %v1413, %v1450
        %v1471 = vadd.f32 %v1414, %v1452
        %v1472 = vadd.f32 %v1415, %v1454
        %v1473 = vadd.f32 %v1416, %v1456
        %v1474 = vadd.f32 %v1417, %v1458
        %vm1475 = vcmask 1044480
        %v1476 = vrot.slane %v1216, 3
        %v1477 = vrot.slane %v1218, 3
        %v1478 = vsel %vm1475, %v1476, %v1477
        %v1479 = vrot.slane %v1221, 3
        %v1480 = vrot.slane %v1223, 3
        %v1481 = vsel %vm1475, %v1479, %v1480
        %v1482 = vrot.slane %v1226, 3
        %v1483 = vrot.slane %v1228, 3
        %v1484 = vsel %vm1475, %v1482, %v1483
        %v1485 = vrot.slane %v1231, 3
        %v1486 = vrot.slane %v1233, 3
        %v1487 = vsel %vm1475, %v1485, %v1486
        %v1488 = vrot.slane %v1236, 3
        %v1489 = vrot.slane %v1238, 3
        %v1490 = vsel %vm1475, %v1488, %v1489
        %v1491 = vrot.slane %v1241, 3
        %v1492 = vrot.slane %v1243, 3
        %v1493 = vsel %vm1475, %v1491, %v1492
        %v1494 = vrot.slane %v1246, 3
        %v1495 = vrot.slane %v1248, 3
        %v1496 = vsel %vm1475, %v1494, %v1495
        %v1497 = vrot.slane %v1251, 3
        %v1498 = vrot.slane %v1253, 3
        %v1499 = vsel %vm1475, %v1497, %v1498
        %1500 = vrot.lane.b32.xlu0 %v1478, 32
        %v1501 = vpop.permute.xlu0 %1500
        %1502 = vrot.lane.b32.xlu0 %v1481, 32
        %v1503 = vpop.permute.xlu0 %1502
        %1504 = vrot.lane.b32.xlu0 %v1484, 32
        %v1505 = vpop.permute.xlu0 %1504
        %1506 = vrot.lane.b32.xlu0 %v1487, 32
        %v1507 = vpop.permute.xlu0 %1506
        %1508 = vrot.lane.b32.xlu0 %v1490, 32
        %v1509 = vpop.permute.xlu0 %1508
        %1510 = vrot.lane.b32.xlu0 %v1493, 32
        %v1511 = vpop.permute.xlu0 %1510
        %1512 = vrot.lane.b32.xlu0 %v1496, 32
        %v1513 = vpop.permute.xlu0 %1512
        %1514 = vrot.lane.b32.xlu0 %v1499, 32
        %v1515 = vpop.permute.xlu0 %1514
        %v1524 = vadd.f32 %v1467, %v1501
        %v1525 = vadd.f32 %v1468, %v1503
        %v1526 = vadd.f32 %v1469, %v1505
        %v1527 = vadd.f32 %v1470, %v1507
        %v1528 = vadd.f32 %v1471, %v1509
        %v1529 = vadd.f32 %v1472, %v1511
        %v1530 = vadd.f32 %v1473, %v1513
        %v1531 = vadd.f32 %v1474, %v1515
        %vm1548 = vcmask 1043456
        %v1549 = vrot.slane %v1265, 4
        %v1550 = vrot.slane %v1267, 4
        %v1551 = vsel %vm1548, %v1549, %v1550
        %v1552 = vrot.slane %v1270, 4
        %v1553 = vrot.slane %v1272, 4
        %v1554 = vsel %vm1548, %v1552, %v1553
        %v1555 = vrot.slane %v1275, 4
        %v1556 = vrot.slane %v1277, 4
        %v1557 = vsel %vm1548, %v1555, %v1556
        %v1558 = vrot.slane %v1280, 4
        %v1559 = vrot.slane %v1282, 4
        %v1560 = vsel %vm1548, %v1558, %v1559
        %v1561 = vrot.slane %v1285, 4
        %v1562 = vrot.slane %v1287, 4
        %v1563 = vsel %vm1548, %v1561, %v1562
        %v1564 = vrot.slane %v1290, 4
        %v1565 = vrot.slane %v1292, 4
        %v1566 = vsel %vm1548, %v1564, %v1565
        %v1567 = vrot.slane %v1295, 4
        %v1568 = vrot.slane %v1297, 4
        %v1569 = vsel %vm1548, %v1567, %v1568
        %v1570 = vrot.slane %v1300, 4
        %v1571 = vrot.slane %v1302, 4
        %v1572 = vsel %vm1548, %v1570, %v1571
        %v1581 = vadd.f32 %v1524, %v1551
        %v1582 = vadd.f32 %v1525, %v1554
        %v1583 = vadd.f32 %v1526, %v1557
        %v1584 = vadd.f32 %v1527, %v1560
        %v1585 = vadd.f32 %v1528, %v1563
        %v1586 = vadd.f32 %v1529, %v1566
        %v1587 = vadd.f32 %v1530, %v1569
        %v1588 = vadd.f32 %v1531, %v1572
        %vm1589 = vcmask 1042432
        %v1590 = vrot.slane %v1265, 5
        %v1591 = vrot.slane %v1267, 5
        %v1592 = vsel %vm1589, %v1590, %v1591
        %v1593 = vrot.slane %v1270, 5
        %v1594 = vrot.slane %v1272, 5
        %v1595 = vsel %vm1589, %v1593, %v1594
        %v1596 = vrot.slane %v1275, 5
        %v1597 = vrot.slane %v1277, 5
        %v1598 = vsel %vm1589, %v1596, %v1597
        %v1599 = vrot.slane %v1280, 5
        %v1600 = vrot.slane %v1282, 5
        %v1601 = vsel %vm1589, %v1599, %v1600
        %v1602 = vrot.slane %v1285, 5
        %v1603 = vrot.slane %v1287, 5
        %v1604 = vsel %vm1589, %v1602, %v1603
        %v1605 = vrot.slane %v1290, 5
        %v1606 = vrot.slane %v1292, 5
        %v1607 = vsel %vm1589, %v1605, %v1606
        %v1608 = vrot.slane %v1295, 5
        %v1609 = vrot.slane %v1297, 5
        %v1610 = vsel %vm1589, %v1608, %v1609
        %v1611 = vrot.slane %v1300, 5
        %v1612 = vrot.slane %v1302, 5
        %v1613 = vsel %vm1589, %v1611, %v1612
        %1614 = vrot.lane.b32.xlu0 %v1592, 96
        %v1615 = vpop.permute.xlu0 %1614
        %1616 = vrot.lane.b32.xlu0 %v1595, 96
        %v1617 = vpop.permute.xlu0 %1616
        %1618 = vrot.lane.b32.xlu0 %v1598, 96
        %v1619 = vpop.permute.xlu0 %1618
        %1620 = vrot.lane.b32.xlu0 %v1601, 96
        %v1621 = vpop.permute.xlu0 %1620
        %1622 = vrot.lane.b32.xlu0 %v1604, 96
        %v1623 = vpop.permute.xlu0 %1622
        %1624 = vrot.lane.b32.xlu0 %v1607, 96
        %v1625 = vpop.permute.xlu0 %1624
        %1626 = vrot.lane.b32.xlu0 %v1610, 96
        %v1627 = vpop.permute.xlu0 %1626
        %1628 = vrot.lane.b32.xlu0 %v1613, 96
        %v1629 = vpop.permute.xlu0 %1628
        %v1638 = vadd.f32 %v1581, %v1615
        %v1639 = vadd.f32 %v1582, %v1617
        %v1640 = vadd.f32 %v1583, %v1619
        %v1641 = vadd.f32 %v1584, %v1621
        %v1642 = vadd.f32 %v1585, %v1623
        %v1643 = vadd.f32 %v1586, %v1625
        %v1644 = vadd.f32 %v1587, %v1627
        %v1645 = vadd.f32 %v1588, %v1629
        %v1646 = vrot.slane %v1265, 6
        %v1647 = vrot.slane %v1267, 6
        %v1648 = vsel %vm1196, %v1646, %v1647
        %v1649 = vrot.slane %v1270, 6
        %v1650 = vrot.slane %v1272, 6
        %v1651 = vsel %vm1196, %v1649, %v1650
        %v1652 = vrot.slane %v1275, 6
        %v1653 = vrot.slane %v1277, 6
        %v1654 = vsel %vm1196, %v1652, %v1653
        %v1655 = vrot.slane %v1280, 6
        %v1656 = vrot.slane %v1282, 6
        %v1657 = vsel %vm1196, %v1655, %v1656
        %v1658 = vrot.slane %v1285, 6
        %v1659 = vrot.slane %v1287, 6
        %v1660 = vsel %vm1196, %v1658, %v1659
        %v1661 = vrot.slane %v1290, 6
        %v1662 = vrot.slane %v1292, 6
        %v1663 = vsel %vm1196, %v1661, %v1662
        %v1664 = vrot.slane %v1295, 6
        %v1665 = vrot.slane %v1297, 6
        %v1666 = vsel %vm1196, %v1664, %v1665
        %v1667 = vrot.slane %v1300, 6
        %v1668 = vrot.slane %v1302, 6
        %v1669 = vsel %vm1196, %v1667, %v1668
        %1670 = vrot.lane.b32.xlu0 %v1648, 64
        %v1671 = vpop.permute.xlu0 %1670
        %1672 = vrot.lane.b32.xlu0 %v1651, 64
        %v1673 = vpop.permute.xlu0 %1672
        %1674 = vrot.lane.b32.xlu0 %v1654, 64
        %v1675 = vpop.permute.xlu0 %1674
        %1676 = vrot.lane.b32.xlu0 %v1657, 64
        %v1677 = vpop.permute.xlu0 %1676
        %1678 = vrot.lane.b32.xlu0 %v1660, 64
        %v1679 = vpop.permute.xlu0 %1678
        %1680 = vrot.lane.b32.xlu0 %v1663, 64
        %v1681 = vpop.permute.xlu0 %1680
        %1682 = vrot.lane.b32.xlu0 %v1666, 64
        %v1683 = vpop.permute.xlu0 %1682
        %1684 = vrot.lane.b32.xlu0 %v1669, 64
        %v1685 = vpop.permute.xlu0 %1684
        %v1694 = vadd.f32 %v1638, %v1671
        %v1695 = vadd.f32 %v1639, %v1673
        %v1696 = vadd.f32 %v1640, %v1675
        %v1697 = vadd.f32 %v1641, %v1677
        %v1698 = vadd.f32 %v1642, %v1679
        %v1699 = vadd.f32 %v1643, %v1681
        %v1700 = vadd.f32 %v1644, %v1683
        %v1701 = vadd.f32 %v1645, %v1685
        %vm1702 = vcmask 1040384
        %v1703 = vrot.slane %v1265, 7
        %v1704 = vrot.slane %v1267, 7
        %v1705 = vsel %vm1702, %v1703, %v1704
        %v1706 = vrot.slane %v1270, 7
        %v1707 = vrot.slane %v1272, 7
        %v1708 = vsel %vm1702, %v1706, %v1707
        %v1709 = vrot.slane %v1275, 7
        %v1710 = vrot.slane %v1277, 7
        %v1711 = vsel %vm1702, %v1709, %v1710
        %v1712 = vrot.slane %v1280, 7
        %v1713 = vrot.slane %v1282, 7
        %v1714 = vsel %vm1702, %v1712, %v1713
        %v1715 = vrot.slane %v1285, 7
        %v1716 = vrot.slane %v1287, 7
        %v1717 = vsel %vm1702, %v1715, %v1716
        %v1718 = vrot.slane %v1290, 7
        %v1719 = vrot.slane %v1292, 7
        %v1720 = vsel %vm1702, %v1718, %v1719
        %v1721 = vrot.slane %v1295, 7
        %v1722 = vrot.slane %v1297, 7
        %v1723 = vsel %vm1702, %v1721, %v1722
        %v1724 = vrot.slane %v1300, 7
        %v1725 = vrot.slane %v1302, 7
        %v1726 = vsel %vm1702, %v1724, %v1725
        %1727 = vrot.lane.b32.xlu0 %v1705, 32
        %v1728 = vpop.permute.xlu0 %1727
        %1729 = vrot.lane.b32.xlu0 %v1708, 32
        %v1730 = vpop.permute.xlu0 %1729
        %1731 = vrot.lane.b32.xlu0 %v1711, 32
        %v1732 = vpop.permute.xlu0 %1731
        %1733 = vrot.lane.b32.xlu0 %v1714, 32
        %v1734 = vpop.permute.xlu0 %1733
        %1735 = vrot.lane.b32.xlu0 %v1717, 32
        %v1736 = vpop.permute.xlu0 %1735
        %1737 = vrot.lane.b32.xlu0 %v1720, 32
        %v1738 = vpop.permute.xlu0 %1737
        %1739 = vrot.lane.b32.xlu0 %v1723, 32
        %v1740 = vpop.permute.xlu0 %1739
        %1741 = vrot.lane.b32.xlu0 %v1726, 32
        %v1742 = vpop.permute.xlu0 %1741
        %v1751 = vadd.f32 %v1694, %v1728
        %v1752 = vadd.f32 %v1695, %v1730
        %v1753 = vadd.f32 %v1696, %v1732
        %v1754 = vadd.f32 %v1697, %v1734
        %v1755 = vadd.f32 %v1698, %v1736
        %v1756 = vadd.f32 %v1699, %v1738
        %v1757 = vadd.f32 %v1700, %v1740
        %v1758 = vadd.f32 %v1701, %v1742
        %v1759 = vadd.f32 %v1751, %v1315
        %v1760 = vadd.f32 %v1752, %v1319
        %v1761 = vadd.f32 %v1753, %v1323
        %v1762 = vadd.f32 %v1754, %v1327
        %v1763 = vadd.f32 %v1755, %v1331
        %v1764 = vadd.f32 %v1756, %v1335
        %v1765 = vadd.f32 %v1757, %v1339
        %v1766 = vadd.f32 %v1758, %v1343
        %v1767 = vld [vmem:[%s2] sm:$0x1]
        %v1769 = vperm.slane %v1767, 0
        %v1771 = vmul.f32 %v1759, %v1769
        %v1772 = vmul.f32 %v1760, %v1769
        %v1773 = vmul.f32 %v1761, %v1769
        %v1774 = vmul.f32 %v1762, %v1769
        %v1775 = vmul.f32 %v1763, %v1769
        %v1776 = vmul.f32 %v1764, %v1769
        %v1777 = vmul.f32 %v1765, %v1769
        %v1778 = vmul.f32 %v1766, %v1769
        %v1779 = vld [vmem:[%s3] sm:$0x1]
        %v1781 = vperm.slane %v1779, 0
        %v1783 = vadd.f32 %v1771, %v1781
        %v1784 = vadd.f32 %v1772, %v1781
        %v1785 = vadd.f32 %v1773, %v1781
        %v1786 = vadd.f32 %v1774, %v1781
        %v1787 = vadd.f32 %v1775, %v1781
        %v1788 = vadd.f32 %v1776, %v1781
        %v1789 = vadd.f32 %v1777, %v1781
        %v1790 = vadd.f32 %v1778, %v1781
        %vm1791 = vcmp.ge.f32.partialorder %v1783, 0.0
        %vm1792 = vcmp.ge.f32.partialorder %v1784, 0.0
        %vm1793 = vcmp.ge.f32.partialorder %v1785, 0.0
        %vm1794 = vcmp.ge.f32.partialorder %v1786, 0.0
        %vm1795 = vcmp.ge.f32.partialorder %v1787, 0.0
        %vm1796 = vcmp.ge.f32.partialorder %v1788, 0.0
        %vm1797 = vcmp.ge.f32.partialorder %v1789, 0.0
        %vm1798 = vcmp.ge.f32.partialorder %v1790, 0.0
        %v1799 = vmul.f32 %v1783, 0.2
        %v1800 = vmul.f32 %v1784, 0.2
        %v1801 = vmul.f32 %v1785, 0.2
        %v1802 = vmul.f32 %v1786, 0.2
        %v1803 = vmul.f32 %v1787, 0.2
        %v1804 = vmul.f32 %v1788, 0.2
        %v1805 = vmul.f32 %v1789, 0.2
        %v1806 = vmul.f32 %v1790, 0.2
        %v1807 = vsel %vm1791, %v1783, %v1799
        %v1808 = vsel %vm1792, %v1784, %v1800
        %v1809 = vsel %vm1793, %v1785, %v1801
        %v1810 = vsel %vm1794, %v1786, %v1802
        %v1811 = vsel %vm1795, %v1787, %v1803
        %v1812 = vsel %vm1796, %v1788, %v1804
        %v1813 = vsel %vm1797, %v1789, %v1805
        %v1814 = vsel %vm1798, %v1790, %v1806
        %v1815 = vpack.c.bf16 %v1807, %v1807
        %v1816 = vpack.c.bf16 %v1808, %v1808
        %v1817 = vpack.c.bf16 %v1809, %v1809
        %v1818 = vpack.c.bf16 %v1810, %v1810
        %v1819 = vpack.c.bf16 %v1811, %v1811
        %v1820 = vpack.c.bf16 %v1812, %v1812
        %v1821 = vpack.c.bf16 %v1813, %v1813
        %v1822 = vpack.c.bf16 %v1814, %v1814
        %vm1823 = vcmask 257024
        %1824 = vst.msk [vmem:[%s204] sm:$0xf] %vm1823, %v1815
        %1825 = vst.msk [vmem:[%s204 + $0x4] sm:$0xf] %vm1823, %v1816
        %1826 = vst.msk [vmem:[%s204 + $0x8] sm:$0xf] %vm1823, %v1817
        %1827 = vst.msk [vmem:[%s204 + $0xc] sm:$0xf] %vm1823, %v1818
        %1828 = vst.msk [vmem:[%s204 + $0x10] sm:$0xf] %vm1823, %v1819
        %1829 = vst.msk [vmem:[%s204 + $0x14] sm:$0xf] %vm1823, %v1820
        %1830 = vst.msk [vmem:[%s204 + $0x18] sm:$0xf] %vm1823, %v1821
        %1831 = vst.msk [vmem:[%s204 + $0x1c] sm:$0xf] %vm1823, %v1822
        %s1832 = sand.u32 %s129, 1
        %s1833 = scalar_lea.sflag [#allocation4], %s1832
        %s1834 = sand.u32 %s129, 1
        %s1835 = smul.addr %s1834, 32
        %s1836 = scalar_lea.vmem [#allocation3], %s1835
        // Predicated region
        $region41: #{tpu_custom_call.1} parent=35 // pred_check
          %p1837 = pneg %p139
        $region42: #{tpu_custom_call.1} parent=35 // pred_check_branch
          %1839 = sbr.rel (%p1837) target = $region44
        $region43: #{tpu_custom_call.1} parent=35 // pred_region
          %s1840 = smul.u32 8, %s23
          %1842 = vsyncadd %s1833, 0
          %s1843 = smul.addr %s22, 8
          %s1844 = sadd.s32 %s1840, %s1843
          %s1845 = smul.addr %s1844, 4
          %s1846 = scalar_lea.hbm %s4, %s1845
          %s1847 = sshll.u32 %s1836, 4
          %s1848 = int_to_ptr.vmem [resolvable:$true] %s1847
          %s1849 = sshll.u32 %s1846, 4
          %s1850 = int_to_ptr.hbm [resolvable:$true] %s1849
          %1855 = dma.vmem_to_hbm [thread:$0]  %s1848, 512, %s1850, %s1833, 64, 64, 4
        $region44: #{tpu_custom_call.1} parent=35 // pred_fallthru
          _
      $region36: #{tpu_custom_call.1} parent=5 // pred_fallthru
        _
      %p1856 = scmp.le.s32.totalorder 2, %s13
      // Predicated region
      $region45: #{tpu_custom_call.1} parent=5 // pred_check
        %p1857 = pneg %p1856
      $region46: #{tpu_custom_call.1} parent=5 // pred_check_branch
        %1859 = sbr.rel (%p1857) target = $region48
      $region47: #{tpu_custom_call.1} parent=5 // pred_region
        %s1860 = ssub.s32 %s13, 2
        // Predicated region
        $region49: #{tpu_custom_call.1} parent=47 // pred_check
          %p1861 = pneg %p145
        $region50: #{tpu_custom_call.1} parent=47 // pred_check_branch
          %1863 = sbr.rel (%p1861) target = $region52
        $region51: #{tpu_custom_call.1} parent=47 // pred_region
          %s1864 = sand.u32 %s130, 1
          %s1865 = scalar_lea.sflag [#allocation4], %s1864
          %s1866 = sand.u32 %s130, 1
          %s1867 = smul.addr %s1866, 32
          %s1868 = scalar_lea.vmem [#allocation3], %s1867
          %1870 = dma.done %s1865, 512
        $region52: #{tpu_custom_call.1} parent=47 // pred_fallthru
          _
      $region48: #{tpu_custom_call.1} parent=5 // pred_fallthru
        _
    $region6: #{tpu_custom_call.1} parent=1 // loop_footer
      %s17 = sadd.s32 1, %s13
    $region7: #{tpu_custom_call.1} parent=1 // loop_footer_branch
      %12 = sbr.rel target = $region3
    $region8: #{tpu_custom_call.1} parent=1 // loop_exit
      _
    %1871 = vsyncpa [#allocation4], 1
    %s1872 = scalar_lea.sflag [#allocation4], 1
    %1873 = vsyncpa %s1872, 1

</llo_original>
